<compile_context>
chip_gen: v6e
topology: v6e:2x2x1
jax: 0.10.0
libtpu: 0.0.40
codegen_flags: <defaults>
</compile_context>

<pallas_src>
import functools

import jax
import jax.numpy as jnp
from jax.experimental import pallas as pl
from jax.experimental.pallas import tpu as pltpu

LN_EPS = 1e-8
LANE = 128
SUBLANE = 8


def _round_up(n, m):
    return (n + m - 1) // m * m


def _pad2(a, shape):
    pads = [(0, s - d) for s, d in zip(shape, a.shape)]
    if all(p == (0, 0) for p in pads):
        return a
    return jnp.pad(a, pads)


def _vmem_capacity_bytes():
    """Physical VMEM per TensorCore; conservative 64 MiB fallback (v7x)."""
    try:
        info = pltpu.get_tpu_info()
        cap = getattr(info, "vmem_capacity_bytes", None)
        if cap:
            return int(cap)
    except Exception:
        pass
    return 64 << 20


def mlp_kernel(x_ref, w1_ref, b1_ref, w2_ref, b2_ref, w3_ref, b3_ref, o_ref,
               *, hidden):
    """One batch tile: Linear->LN->ReLU, Linear->LN->ReLU, Linear."""
    compute_dtype = w1_ref.dtype
    # Cast the input tile in-kernel (hidden under the tile DMA) instead of a
    # wrapper-side pad+cast pass over all of x.
    x = x_ref[...].astype(compute_dtype)

    b1 = b1_ref[...]
    b2 = b2_ref[...]
    b3 = b3_ref[...]

    inv_h = jnp.float32(1.0 / hidden)

    def layernorm_relu(h):
        # Padded hidden lanes of h are exactly zero (zero-padded weight
        # columns and bias lanes), so sums over the padded width divided by
        # the true H are exact.  var = E[h^2] - mean^2 avoids a per-element
        # mask/select; clamp guards f32 cancellation before rsqrt.
        mean = jnp.sum(h, axis=-1, keepdims=True) * inv_h
        mean_sq = jnp.sum(h * h, axis=-1, keepdims=True) * inv_h
        var = jnp.maximum(mean_sq - mean * mean, 0.0)
        y = (h - mean) * jax.lax.rsqrt(var + LN_EPS)   # rsqrt -> EUP slot
        return jnp.maximum(y, 0.0)

    # Layer 1: Linear -> LayerNorm -> ReLU   (Dropout p=0.0 is identity)
    h = jnp.dot(x, w1_ref[...], preferred_element_type=jnp.float32) + b1
    h = layernorm_relu(h)

    # Layer 2: Linear -> LayerNorm -> ReLU
    h = jnp.dot(h.astype(compute_dtype), w2_ref[...],
                preferred_element_type=jnp.float32) + b2
    h = layernorm_relu(h)

    # Output projection (true output width, no padded writeback).
    out = jnp.dot(h.astype(compute_dtype), w3_ref[...],
                  preferred_element_type=jnp.float32) + b3
    o_ref[...] = out.astype(o_ref.dtype)


def mlp_forward(x, params, *, block_b=1024, compute_dtype=jnp.bfloat16):
    """x: [B, in_features] f32. params: dict of w1,b1,w2,b2,w3,b3 (f32).

    Returns [B, out_features] f32.
    """
    B, F_in = x.shape
    H = params["w1"].shape[1]
    F_out = params["w3"].shape[1]

    # Only the hidden dim is lane-padded; in/out feature dims keep their true
    # width (full-dim last axes are legal block shapes).
    H_p = _round_up(H, LANE)

    # Batch tiling: balance tile size against B (avoid a nearly-empty last
    # tile) and aim for >= 2 (even, best-effort) grid steps so v7x's second
    # TensorCore is used via the "parallel" batch axis.
    block_b = max(SUBLANE, _round_up(block_b, SUBLANE))
    if B <= SUBLANE:
        TB = SUBLANE
    else:
        n_tiles = max(pl.cdiv(B, block_b), 2)
        if n_tiles % 2:
            n_tiles += 1
        TB = _round_up(pl.cdiv(B, n_tiles), SUBLANE)
    B_p = _round_up(B, TB)
    num_blocks = B_p // TB

    # Zero-pad the hidden dim of weights/biases (padded lanes stay inert) and
    # cast weights to the MXU compute dtype.  Biases stay f32 (added to the
    # f32 accumulator).  x gets only a (cheap) batch-dim pad, no cast.
    w1 = _pad2(params["w1"], (F_in, H_p)).astype(compute_dtype)
    w2 = _pad2(params["w2"], (H_p, H_p)).astype(compute_dtype)
    w3 = _pad2(params["w3"], (H_p, F_out)).astype(compute_dtype)
    b1 = _pad2(params["b1"], (1, H_p)).astype(jnp.float32)
    b2 = _pad2(params["b2"], (1, H_p)).astype(jnp.float32)
    b3 = params["b3"].astype(jnp.float32)
    x_p = _pad2(x, (B_p, F_in))

    kernel = functools.partial(mlp_kernel, hidden=H)
    resident = lambda i: (0, 0)          # weights/biases: same block every step
    vmem_cap = _vmem_capacity_bytes()

    def run(single_buffer_weights):
        if single_buffer_weights:
            # Constant index_map => DMA'd once; single-buffer the VMEM copy.
            wspec = lambda shp: pl.BlockSpec(shp, resident,
                                             pipeline_mode=pl.Buffered(1))
        else:
            wspec = lambda shp: pl.BlockSpec(shp, resident)

        isz = jnp.dtype(compute_dtype).itemsize
        wbytes = (w1.size + w2.size + w3.size) * isz \
                 + (b1.size + b2.size + b3.size) * 4
        wmult = 1 if single_buffer_weights else 2
        io_bytes = 2 * TB * (F_in + F_out) * 4        # double-buffered x / out
        scratch = 8 * TB * H_p * 4                    # intermediate headroom
        est = wmult * wbytes + io_bytes + scratch + (4 << 20)
        # Per-chip cap: ~7/8 of physical VMEM (≈56 MiB v7x, ≈112 MiB v5e/v6e).
        vmem_limit = int(min(max(est, 16 << 20), vmem_cap * 7 // 8))

        return pl.pallas_call(
            kernel,
            out_shape=jax.ShapeDtypeStruct((B_p, F_out), jnp.float32),
            grid=(num_blocks,),
            in_specs=[
                pl.BlockSpec((TB, F_in), lambda i: (i, 0)),
                wspec((F_in, H_p)),
                wspec((1, H_p)),
                wspec((H_p, H_p)),
                wspec((1, H_p)),
                wspec((H_p, F_out)),
                wspec((1, F_out)),
            ],
            out_specs=pl.BlockSpec((TB, F_out), lambda i: (i, 0)),
            compiler_params=pltpu.CompilerParams(
                dimension_semantics=("parallel",),
                vmem_limit_bytes=vmem_limit,
            ),
        )(x_p, w1, b1, w2, b2, w3, b3)

    try:
        out_p = run(single_buffer_weights=True)
    except Exception:
        # Fallback if this Pallas/Mosaic version rejects Buffered(1) inputs.
        out_p = run(single_buffer_weights=False)

    return out_p[:B]


def init_params(key, in_features, hidden_size, out_features):
    """Deterministic init mimicking nn.Linear default (uniform +/- 1/sqrt(fan_in))."""
    ks = jax.random.split(key, 6)

    def lin(kw, kb, fan_in, fan_out):
        bound = 1.0 / jnp.sqrt(fan_in)
        w = jax.random.uniform(kw, (fan_in, fan_out), jnp.float32, -bound, bound)
        b = jax.random.uniform(kb, (1, fan_out), jnp.float32, -bound, bound)
        return w, b

    w1, b1 = lin(ks[0], ks[1], in_features, hidden_size)
    w2, b2 = lin(ks[2], ks[3], hidden_size, hidden_size)
    w3, b3 = lin(ks[4], ks[5], hidden_size, out_features)
    return {"w1": w1, "b1": b1, "w2": w2, "b2": b2, "w3": w3, "b3": b3}


def mlp_ref(x, p):
    def ln(h):
        m = jnp.mean(h, axis=-1, keepdims=True)
        c = h - m
        v = jnp.mean(c * c, axis=-1, keepdims=True)
        return c / jnp.sqrt(v + LN_EPS)

    h = jnp.maximum(ln(x @ p["w1"] + p["b1"]), 0.0)
    h = jnp.maximum(ln(h @ p["w2"] + p["b2"]), 0.0)
    return h @ p["w3"] + p["b3"]


if __name__ == "__main__":
    # TODO(synk): Dropout is identity at p=0.0 / eval mode, so it is not modeled.
    # TODO(synk): only the scalar hidden_size branch is implemented; a list of
    # hidden sizes would chain the same fused Linear->LN->ReLU block.
    in_features, hidden_size, out_features = 32, 64, 16
    batch = 10  # not a multiple of 8: exercises batch padding + 2 grid steps

    key = jax.random.PRNGKey(0)
    k_x, k_p = jax.random.split(key)
    x = jax.random.normal(k_x, (batch, in_features), jnp.float32)
    params = init_params(k_p, in_features, hidden_size, out_features)

    ref = mlp_ref(x, params)

    # f32 operand path (tight-tolerance correctness path).
    out_f32 = jax.block_until_ready(
        mlp_forward(x, params, compute_dtype=jnp.float32)
    )
    assert out_f32.shape == (batch, out_features)
    assert jnp.allclose(out_f32, ref, atol=1e-4, rtol=1e-4)

    # Default path: bf16 MXU operands, f32 accumulation / f32 LayerNorm.
    out_bf16 = jax.block_until_ready(mlp_forward(x, params))
    assert out_bf16.shape == (batch, out_features)
    assert jnp.allclose(out_bf16, ref, atol=5e-2, rtol=5e-2)

    print("KERNEL_OK")
</pallas_src>

<mosaic_0001>
module attributes {stable_mosaic.version = 11 : i64} {
  func.func @mlp_kernel(%arg0: i32, %arg1: memref<8x32xf32, #tpu.memory_space<vmem>>, %arg2: memref<32x128xf32, #tpu.memory_space<vmem>>, %arg3: memref<1x128xf32, #tpu.memory_space<vmem>>, %arg4: memref<128x128xf32, #tpu.memory_space<vmem>>, %arg5: memref<1x128xf32, #tpu.memory_space<vmem>>, %arg6: memref<128x16xf32, #tpu.memory_space<vmem>>, %arg7: memref<1x16xf32, #tpu.memory_space<vmem>>, %arg8: memref<8x16xf32, #tpu.memory_space<vmem>>) attributes {dimension_semantics = [#tpu.dimension_semantics<parallel>], iteration_bounds = array<i64: 2>, scalar_prefetch = 0 : i64, scratch_operands = 0 : i64, tpu.core_type = #tpu.core_type<tc>, window_params = [{transform_indices = @transform_0, window_bounds = array<i64: 8, 32>}, {pipeline_mode = #tpu.pipeline_mode<synchronous>, transform_indices = @transform_1, window_bounds = array<i64: 32, 128>}, {pipeline_mode = #tpu.pipeline_mode<synchronous>, transform_indices = @transform_2, window_bounds = array<i64: 1, 128>}, {pipeline_mode = #tpu.pipeline_mode<synchronous>, transform_indices = @transform_3, window_bounds = array<i64: 128, 128>}, {pipeline_mode = #tpu.pipeline_mode<synchronous>, transform_indices = @transform_4, window_bounds = array<i64: 1, 128>}, {pipeline_mode = #tpu.pipeline_mode<synchronous>, transform_indices = @transform_5, window_bounds = array<i64: 128, 16>}, {pipeline_mode = #tpu.pipeline_mode<synchronous>, transform_indices = @transform_6, window_bounds = array<i64: 1, 16>}, {transform_indices = @transform_7, window_bounds = array<i64: 8, 16>}]} {
    %c0 = arith.constant 0 : index
    %c0_0 = arith.constant 0 : index
    %0 = vector.load %arg1[%c0, %c0_0] : memref<8x32xf32, #tpu.memory_space<vmem>>, vector<8x32xf32>
    %c0_1 = arith.constant 0 : index
    %c0_2 = arith.constant 0 : index
    %1 = vector.load %arg3[%c0_1, %c0_2] : memref<1x128xf32, #tpu.memory_space<vmem>>, vector<1x128xf32>
    %c0_3 = arith.constant 0 : index
    %c0_4 = arith.constant 0 : index
    %2 = vector.load %arg5[%c0_3, %c0_4] : memref<1x128xf32, #tpu.memory_space<vmem>>, vector<1x128xf32>
    %c0_5 = arith.constant 0 : index
    %c0_6 = arith.constant 0 : index
    %3 = vector.load %arg7[%c0_5, %c0_6] : memref<1x16xf32, #tpu.memory_space<vmem>>, vector<1x16xf32>
    %c0_7 = arith.constant 0 : index
    %c0_8 = arith.constant 0 : index
    %4 = vector.load %arg2[%c0_7, %c0_8] : memref<32x128xf32, #tpu.memory_space<vmem>>, vector<32x128xf32>
    %cst = arith.constant dense<0.000000e+00> : vector<8x128xf32>
    %5 = tpu.matmul %0, %4, %cst {dimension_numbers = #tpu.dot_dimension_numbers<[1], [0], [0], [1], [0, 0, 1, 1], [], []>} : vector<8x32xf32>, vector<32x128xf32>, vector<8x128xf32> -> vector<8x128xf32>
    %6 = vector.broadcast %1 : vector<1x128xf32> to vector<8x128xf32>
    %7 = arith.addf %5, %6 : vector<8x128xf32>
    %cst_9 = arith.constant dense<0.000000e+00> : vector<8xf32>
    %8 = vector.multi_reduction <add>, %7, %cst_9 [1] : vector<8x128xf32> to vector<8xf32>
    %9 = vector.shape_cast %8 : vector<8xf32> to vector<8x1xf32>
    %cst_10 = arith.constant 1.562500e-02 : f32
    %10 = vector.broadcast %cst_10 : f32 to vector<8x1xf32>
    %11 = arith.mulf %9, %10 : vector<8x1xf32>
    %12 = arith.mulf %7, %7 : vector<8x128xf32>
    %cst_11 = arith.constant dense<0.000000e+00> : vector<8xf32>
    %13 = vector.multi_reduction <add>, %12, %cst_11 [1] : vector<8x128xf32> to vector<8xf32>
    %14 = vector.shape_cast %13 : vector<8xf32> to vector<8x1xf32>
    %cst_12 = arith.constant 1.562500e-02 : f32
    %15 = vector.broadcast %cst_12 : f32 to vector<8x1xf32>
    %16 = arith.mulf %14, %15 : vector<8x1xf32>
    %17 = arith.mulf %11, %11 : vector<8x1xf32>
    %18 = arith.subf %16, %17 : vector<8x1xf32>
    %cst_13 = arith.constant 0.000000e+00 : f32
    %19 = vector.broadcast %cst_13 : f32 to vector<8x1xf32>
    %20 = arith.maximumf %18, %19 : vector<8x1xf32>
    %21 = vector.broadcast %11 : vector<8x1xf32> to vector<8x128xf32>
    %22 = arith.subf %7, %21 : vector<8x128xf32>
    %cst_14 = arith.constant 9.99999993E-9 : f32
    %23 = vector.broadcast %cst_14 : f32 to vector<8x1xf32>
    %24 = arith.addf %20, %23 : vector<8x1xf32>
    %25 = math.rsqrt %24 : vector<8x1xf32>
    %26 = vector.broadcast %25 : vector<8x1xf32> to vector<8x128xf32>
    %27 = arith.mulf %22, %26 : vector<8x128xf32>
    %cst_15 = arith.constant 0.000000e+00 : f32
    %28 = vector.broadcast %cst_15 : f32 to vector<8x128xf32>
    %29 = arith.maximumf %27, %28 : vector<8x128xf32>
    %c0_16 = arith.constant 0 : index
    %c0_17 = arith.constant 0 : index
    %30 = vector.load %arg4[%c0_16, %c0_17] : memref<128x128xf32, #tpu.memory_space<vmem>>, vector<128x128xf32>
    %cst_18 = arith.constant dense<0.000000e+00> : vector<8x128xf32>
    %31 = tpu.matmul %29, %30, %cst_18 {dimension_numbers = #tpu.dot_dimension_numbers<[1], [0], [0], [1], [0, 0, 1, 1], [], []>} : vector<8x128xf32>, vector<128x128xf32>, vector<8x128xf32> -> vector<8x128xf32>
    %32 = vector.broadcast %2 : vector<1x128xf32> to vector<8x128xf32>
    %33 = arith.addf %31, %32 : vector<8x128xf32>
    %cst_19 = arith.constant dense<0.000000e+00> : vector<8xf32>
    %34 = vector.multi_reduction <add>, %33, %cst_19 [1] : vector<8x128xf32> to vector<8xf32>
    %35 = vector.shape_cast %34 : vector<8xf32> to vector<8x1xf32>
    %cst_20 = arith.constant 1.562500e-02 : f32
    %36 = vector.broadcast %cst_20 : f32 to vector<8x1xf32>
    %37 = arith.mulf %35, %36 : vector<8x1xf32>
    %38 = arith.mulf %33, %33 : vector<8x128xf32>
    %cst_21 = arith.constant dense<0.000000e+00> : vector<8xf32>
    %39 = vector.multi_reduction <add>, %38, %cst_21 [1] : vector<8x128xf32> to vector<8xf32>
    %40 = vector.shape_cast %39 : vector<8xf32> to vector<8x1xf32>
    %cst_22 = arith.constant 1.562500e-02 : f32
    %41 = vector.broadcast %cst_22 : f32 to vector<8x1xf32>
    %42 = arith.mulf %40, %41 : vector<8x1xf32>
    %43 = arith.mulf %37, %37 : vector<8x1xf32>
    %44 = arith.subf %42, %43 : vector<8x1xf32>
    %cst_23 = arith.constant 0.000000e+00 : f32
    %45 = vector.broadcast %cst_23 : f32 to vector<8x1xf32>
    %46 = arith.maximumf %44, %45 : vector<8x1xf32>
    %47 = vector.broadcast %37 : vector<8x1xf32> to vector<8x128xf32>
    %48 = arith.subf %33, %47 : vector<8x128xf32>
    %cst_24 = arith.constant 9.99999993E-9 : f32
    %49 = vector.broadcast %cst_24 : f32 to vector<8x1xf32>
    %50 = arith.addf %46, %49 : vector<8x1xf32>
    %51 = math.rsqrt %50 : vector<8x1xf32>
    %52 = vector.broadcast %51 : vector<8x1xf32> to vector<8x128xf32>
    %53 = arith.mulf %48, %52 : vector<8x128xf32>
    %cst_25 = arith.constant 0.000000e+00 : f32
    %54 = vector.broadcast %cst_25 : f32 to vector<8x128xf32>
    %55 = arith.maximumf %53, %54 : vector<8x128xf32>
    %c0_26 = arith.constant 0 : index
    %c0_27 = arith.constant 0 : index
    %56 = vector.load %arg6[%c0_26, %c0_27] : memref<128x16xf32, #tpu.memory_space<vmem>>, vector<128x16xf32>
    %cst_28 = arith.constant dense<0.000000e+00> : vector<8x16xf32>
    %57 = tpu.matmul %55, %56, %cst_28 {dimension_numbers = #tpu.dot_dimension_numbers<[1], [0], [0], [1], [0, 0, 1, 1], [], []>} : vector<8x128xf32>, vector<128x16xf32>, vector<8x16xf32> -> vector<8x16xf32>
    %58 = vector.broadcast %3 : vector<1x16xf32> to vector<8x16xf32>
    %59 = arith.addf %57, %58 : vector<8x16xf32>
    %c0_29 = arith.constant 0 : index
    %c0_30 = arith.constant 0 : index
    %60 = vector.load %arg8[%c0_29, %c0_30] : memref<8x16xf32, #tpu.memory_space<vmem>>, vector<8x16xf32>
    tpu.vector_store %arg8[%c0_29, %c0_30], %59 {strides = array<i32>} : memref<8x16xf32, #tpu.memory_space<vmem>>, vector<8x16xf32>,
    return
  }
  func.func @transform_0(%arg0: i32) -> (i32, i32) {
    %c0_i32 = arith.constant 0 : i32
    %c0_i32_0 = arith.constant 0 : i32
    return %arg0, %c0_i32 : i32, i32
  }
  func.func @transform_1(%arg0: i32) -> (i32, i32) {
    %c0_i32 = arith.constant 0 : i32
    %c0_i32_0 = arith.constant 0 : i32
    %c0_i32_1 = arith.constant 0 : i32
    return %c0_i32, %c0_i32_0 : i32, i32
  }
  func.func @transform_2(%arg0: i32) -> (i32, i32) {
    %c0_i32 = arith.constant 0 : i32
    %c0_i32_0 = arith.constant 0 : i32
    %c0_i32_1 = arith.constant 0 : i32
    return %c0_i32, %c0_i32_0 : i32, i32
  }
  func.func @transform_3(%arg0: i32) -> (i32, i32) {
    %c0_i32 = arith.constant 0 : i32
    %c0_i32_0 = arith.constant 0 : i32
    %c0_i32_1 = arith.constant 0 : i32
    return %c0_i32, %c0_i32_0 : i32, i32
  }
  func.func @transform_4(%arg0: i32) -> (i32, i32) {
    %c0_i32 = arith.constant 0 : i32
    %c0_i32_0 = arith.constant 0 : i32
    %c0_i32_1 = arith.constant 0 : i32
    return %c0_i32, %c0_i32_0 : i32, i32
  }
  func.func @transform_5(%arg0: i32) -> (i32, i32) {
    %c0_i32 = arith.constant 0 : i32
    %c0_i32_0 = arith.constant 0 : i32
    %c0_i32_1 = arith.constant 0 : i32
    return %c0_i32, %c0_i32_0 : i32, i32
  }
  func.func @transform_6(%arg0: i32) -> (i32, i32) {
    %c0_i32 = arith.constant 0 : i32
    %c0_i32_0 = arith.constant 0 : i32
    %c0_i32_1 = arith.constant 0 : i32
    return %c0_i32, %c0_i32_0 : i32, i32
  }
  func.func @transform_7(%arg0: i32) -> (i32, i32) {
    %c0_i32 = arith.constant 0 : i32
    %c0_i32_0 = arith.constant 0 : i32
    return %arg0, %c0_i32 : i32, i32
  }
}

module attributes {stable_mosaic.version = 11 : i64} {
  func.func @mlp_kernel(%arg0: i32, %arg1: memref<8x32xf32, #tpu.memory_space<vmem>>, %arg2: memref<32x128xf32, #tpu.memory_space<vmem>>, %arg3: memref<1x128xf32, #tpu.memory_space<vmem>>, %arg4: memref<128x128xf32, #tpu.memory_space<vmem>>, %arg5: memref<1x128xf32, #tpu.memory_space<vmem>>, %arg6: memref<128x16xf32, #tpu.memory_space<vmem>>, %arg7: memref<1x16xf32, #tpu.memory_space<vmem>>, %arg8: memref<8x16xf32, #tpu.memory_space<vmem>>) attributes {dimension_semantics = [#tpu.dimension_semantics<parallel>], iteration_bounds = array<i64: 2>, scalar_prefetch = 0 : i64, scratch_operands = 0 : i64, tpu.core_type = #tpu.core_type<tc>, window_params = [{transform_indices = @transform_0, window_bounds = array<i64: 8, 32>}, {pipeline_mode = #tpu.pipeline_mode<synchronous>, transform_indices = @transform_1, window_bounds = array<i64: 32, 128>}, {pipeline_mode = #tpu.pipeline_mode<synchronous>, transform_indices = @transform_2, window_bounds = array<i64: 1, 128>}, {pipeline_mode = #tpu.pipeline_mode<synchronous>, transform_indices = @transform_3, window_bounds = array<i64: 128, 128>}, {pipeline_mode = #tpu.pipeline_mode<synchronous>, transform_indices = @transform_4, window_bounds = array<i64: 1, 128>}, {pipeline_mode = #tpu.pipeline_mode<synchronous>, transform_indices = @transform_5, window_bounds = array<i64: 128, 16>}, {pipeline_mode = #tpu.pipeline_mode<synchronous>, transform_indices = @transform_6, window_bounds = array<i64: 1, 16>}, {transform_indices = @transform_7, window_bounds = array<i64: 8, 16>}]} {
    %c0 = arith.constant 0 : index
    %c0_0 = arith.constant 0 : index
    %0 = vector.load %arg1[%c0, %c0_0] : memref<8x32xf32, #tpu.memory_space<vmem>>, vector<8x32xf32>
    %c0_1 = arith.constant 0 : index
    %c0_2 = arith.constant 0 : index
    %1 = vector.load %arg3[%c0_1, %c0_2] : memref<1x128xf32, #tpu.memory_space<vmem>>, vector<1x128xf32>
    %c0_3 = arith.constant 0 : index
    %c0_4 = arith.constant 0 : index
    %2 = vector.load %arg5[%c0_3, %c0_4] : memref<1x128xf32, #tpu.memory_space<vmem>>, vector<1x128xf32>
    %c0_5 = arith.constant 0 : index
    %c0_6 = arith.constant 0 : index
    %3 = vector.load %arg7[%c0_5, %c0_6] : memref<1x16xf32, #tpu.memory_space<vmem>>, vector<1x16xf32>
    %c0_7 = arith.constant 0 : index
    %c0_8 = arith.constant 0 : index
    %4 = vector.load %arg2[%c0_7, %c0_8] : memref<32x128xf32, #tpu.memory_space<vmem>>, vector<32x128xf32>
    %cst = arith.constant dense<0.000000e+00> : vector<8x128xf32>
    %5 = tpu.matmul %0, %4, %cst {dimension_numbers = #tpu.dot_dimension_numbers<[1], [0], [0], [1], [0, 0, 1, 1], [], []>} : vector<8x32xf32>, vector<32x128xf32>, vector<8x128xf32> -> vector<8x128xf32>
    %6 = vector.broadcast %1 : vector<1x128xf32> to vector<8x128xf32>
    %7 = arith.addf %5, %6 : vector<8x128xf32>
    %cst_9 = arith.constant dense<0.000000e+00> : vector<8xf32>
    %8 = vector.multi_reduction <add>, %7, %cst_9 [1] : vector<8x128xf32> to vector<8xf32>
    %9 = vector.shape_cast %8 : vector<8xf32> to vector<8x1xf32>
    %cst_10 = arith.constant 1.562500e-02 : f32
    %10 = vector.broadcast %cst_10 : f32 to vector<8x1xf32>
    %11 = arith.mulf %9, %10 : vector<8x1xf32>
    %12 = arith.mulf %7, %7 : vector<8x128xf32>
    %cst_11 = arith.constant dense<0.000000e+00> : vector<8xf32>
    %13 = vector.multi_reduction <add>, %12, %cst_11 [1] : vector<8x128xf32> to vector<8xf32>
    %14 = vector.shape_cast %13 : vector<8xf32> to vector<8x1xf32>
    %cst_12 = arith.constant 1.562500e-02 : f32
    %15 = vector.broadcast %cst_12 : f32 to vector<8x1xf32>
    %16 = arith.mulf %14, %15 : vector<8x1xf32>
    %17 = arith.mulf %11, %11 : vector<8x1xf32>
    %18 = arith.subf %16, %17 : vector<8x1xf32>
    %cst_13 = arith.constant 0.000000e+00 : f32
    %19 = vector.broadcast %cst_13 : f32 to vector<8x1xf32>
    %20 = arith.maximumf %18, %19 : vector<8x1xf32>
    %21 = vector.broadcast %11 : vector<8x1xf32> to vector<8x128xf32>
    %22 = arith.subf %7, %21 : vector<8x128xf32>
    %cst_14 = arith.constant 9.99999993E-9 : f32
    %23 = vector.broadcast %cst_14 : f32 to vector<8x1xf32>
    %24 = arith.addf %20, %23 : vector<8x1xf32>
    %25 = math.rsqrt %24 : vector<8x1xf32>
    %26 = vector.broadcast %25 : vector<8x1xf32> to vector<8x128xf32>
    %27 = arith.mulf %22, %26 : vector<8x128xf32>
    %cst_15 = arith.constant 0.000000e+00 : f32
    %28 = vector.broadcast %cst_15 : f32 to vector<8x128xf32>
    %29 = arith.maximumf %27, %28 : vector<8x128xf32>
    %c0_16 = arith.constant 0 : index
    %c0_17 = arith.constant 0 : index
    %30 = vector.load %arg4[%c0_16, %c0_17] : memref<128x128xf32, #tpu.memory_space<vmem>>, vector<128x128xf32>
    %cst_18 = arith.constant dense<0.000000e+00> : vector<8x128xf32>
    %31 = tpu.matmul %29, %30, %cst_18 {dimension_numbers = #tpu.dot_dimension_numbers<[1], [0], [0], [1], [0, 0, 1, 1], [], []>} : vector<8x128xf32>, vector<128x128xf32>, vector<8x128xf32> -> vector<8x128xf32>
    %32 = vector.broadcast %2 : vector<1x128xf32> to vector<8x128xf32>
    %33 = arith.addf %31, %32 : vector<8x128xf32>
    %cst_19 = arith.constant dense<0.000000e+00> : vector<8xf32>
    %34 = vector.multi_reduction <add>, %33, %cst_19 [1] : vector<8x128xf32> to vector<8xf32>
    %35 = vector.shape_cast %34 : vector<8xf32> to vector<8x1xf32>
    %cst_20 = arith.constant 1.562500e-02 : f32
    %36 = vector.broadcast %cst_20 : f32 to vector<8x1xf32>
    %37 = arith.mulf %35, %36 : vector<8x1xf32>
    %38 = arith.mulf %33, %33 : vector<8x128xf32>
    %cst_21 = arith.constant dense<0.000000e+00> : vector<8xf32>
    %39 = vector.multi_reduction <add>, %38, %cst_21 [1] : vector<8x128xf32> to vector<8xf32>
    %40 = vector.shape_cast %39 : vector<8xf32> to vector<8x1xf32>
    %cst_22 = arith.constant 1.562500e-02 : f32
    %41 = vector.broadcast %cst_22 : f32 to vector<8x1xf32>
    %42 = arith.mulf %40, %41 : vector<8x1xf32>
    %43 = arith.mulf %37, %37 : vector<8x1xf32>
    %44 = arith.subf %42, %43 : vector<8x1xf32>
    %cst_23 = arith.constant 0.000000e+00 : f32
    %45 = vector.broadcast %cst_23 : f32 to vector<8x1xf32>
    %46 = arith.maximumf %44, %45 : vector<8x1xf32>
    %47 = vector.broadcast %37 : vector<8x1xf32> to vector<8x128xf32>
    %48 = arith.subf %33, %47 : vector<8x128xf32>
    %cst_24 = arith.constant 9.99999993E-9 : f32
    %49 = vector.broadcast %cst_24 : f32 to vector<8x1xf32>
    %50 = arith.addf %46, %49 : vector<8x1xf32>
    %51 = math.rsqrt %50 : vector<8x1xf32>
    %52 = vector.broadcast %51 : vector<8x1xf32> to vector<8x128xf32>
    %53 = arith.mulf %48, %52 : vector<8x128xf32>
    %cst_25 = arith.constant 0.000000e+00 : f32
    %54 = vector.broadcast %cst_25 : f32 to vector<8x128xf32>
    %55 = arith.maximumf %53, %54 : vector<8x128xf32>
    %c0_26 = arith.constant 0 : index
    %c0_27 = arith.constant 0 : index
    %56 = vector.load %arg6[%c0_26, %c0_27] : memref<128x16xf32, #tpu.memory_space<vmem>>, vector<128x16xf32>
    %cst_28 = arith.constant dense<0.000000e+00> : vector<8x16xf32>
    %57 = tpu.matmul %55, %56, %cst_28 {dimension_numbers = #tpu.dot_dimension_numbers<[1], [0], [0], [1], [0, 0, 1, 1], [], []>} : vector<8x128xf32>, vector<128x16xf32>, vector<8x16xf32> -> vector<8x16xf32>
    %58 = vector.broadcast %3 : vector<1x16xf32> to vector<8x16xf32>
    %59 = arith.addf %57, %58 : vector<8x16xf32>
    %c0_29 = arith.constant 0 : index
    %c0_30 = arith.constant 0 : index
    %60 = vector.load %arg8[%c0_29, %c0_30] : memref<8x16xf32, #tpu.memory_space<vmem>>, vector<8x16xf32>
    tpu.vector_store %arg8[%c0_29, %c0_30], %59 {strides = array<i32>} : memref<8x16xf32, #tpu.memory_space<vmem>>, vector<8x16xf32>,
    return
  }
  func.func @transform_0(%arg0: i32) -> (i32, i32) {
    %c0_i32 = arith.constant 0 : i32
    %c0_i32_0 = arith.constant 0 : i32
    return %arg0, %c0_i32 : i32, i32
  }
  func.func @transform_1(%arg0: i32) -> (i32, i32) {
    %c0_i32 = arith.constant 0 : i32
    %c0_i32_0 = arith.constant 0 : i32
    %c0_i32_1 = arith.constant 0 : i32
    return %c0_i32, %c0_i32_0 : i32, i32
  }
  func.func @transform_2(%arg0: i32) -> (i32, i32) {
    %c0_i32 = arith.constant 0 : i32
    %c0_i32_0 = arith.constant 0 : i32
    %c0_i32_1 = arith.constant 0 : i32
    return %c0_i32, %c0_i32_0 : i32, i32
  }
  func.func @transform_3(%arg0: i32) -> (i32, i32) {
    %c0_i32 = arith.constant 0 : i32
    %c0_i32_0 = arith.constant 0 : i32
    %c0_i32_1 = arith.constant 0 : i32
    return %c0_i32, %c0_i32_0 : i32, i32
  }
  func.func @transform_4(%arg0: i32) -> (i32, i32) {
    %c0_i32 = arith.constant 0 : i32
    %c0_i32_0 = arith.constant 0 : i32
    %c0_i32_1 = arith.constant 0 : i32
    return %c0_i32, %c0_i32_0 : i32, i32
  }
  func.func @transform_5(%arg0: i32) -> (i32, i32) {
    %c0_i32 = arith.constant 0 : i32
    %c0_i32_0 = arith.constant 0 : i32
    %c0_i32_1 = arith.constant 0 : i32
    return %c0_i32, %c0_i32_0 : i32, i32
  }
  func.func @transform_6(%arg0: i32) -> (i32, i32) {
    %c0_i32 = arith.constant 0 : i32
    %c0_i32_0 = arith.constant 0 : i32
    %c0_i32_1 = arith.constant 0 : i32
    return %c0_i32, %c0_i32_0 : i32, i32
  }
  func.func @transform_7(%arg0: i32) -> (i32, i32) {
    %c0_i32 = arith.constant 0 : i32
    %c0_i32_0 = arith.constant 0 : i32
    return %arg0, %c0_i32 : i32, i32
  }
}

</mosaic_0001>

<llo_original>
// kernel: tpu_custom_call.1
$region0: #{tpu_custom_call.1}
  #allocation0 [shape = 'u32[]', space=smem, size = 0x4, offset = 0x4, fixed_abs, tag = 'smem constant byte address 0x4 - core index']
  #allocation1 [shape = 'u32[144,128]{1,0:T(1,128)}', space=vmem, size = 0x12000, scoped, tag = 'internal scratch']
  %s0 = inlined_call_operand.vmem [shape: f32[16,32], index: 0, kind: input, shape index: {}]
  %s1 = inlined_call_operand.hbm [shape: f32[32,128], index: 1, kind: input, shape index: {}]
  %s2 = inlined_call_operand.vmem [shape: f32[1,128], index: 2, kind: input, shape index: {}]
  %s3 = inlined_call_operand.vmem [shape: f32[128,128], index: 3, kind: input, shape index: {}]
  %s4 = inlined_call_operand.vmem [shape: f32[1,128], index: 4, kind: input, shape index: {}]
  %s5 = inlined_call_operand.vmem [shape: f32[128,16], index: 5, kind: input, shape index: {}]
  %s6 = inlined_call_operand.vmem [shape: f32[1,16], index: 6, kind: input, shape index: {}]
  %s7 = inlined_call_operand.hbm [shape: f32[16,16], index: 7, kind: output, shape index: {}]
  %s8 = sld [smem:[#allocation0]]
  $region65: #{tpu_custom_call.1} parent=0
    _
  %s10 = ssub.s32 1, %s8
  %s11 = scalar_select 0, %s10, %s8
  $region1: #{tpu_custom_call.1} parent=0
    #allocation2 [shape = 'u8[16384]{0}', space=vmem, size = 0x4000, scoped, tag = 'input window, operand 1, single buffered']
    #allocation3 [shape = 's32[2]{0}', space=sflag, size = 0x8, scoped, tag = 'scoped memory for tpu_custom_call.1']
    #allocation4 [shape = 's32[2]{0}', space=sflag, size = 0x8, scoped, tag = 'scoped memory for tpu_custom_call.1']
    #allocation5 [shape = 'u8[8192]{0}', space=vmem, size = 0x2000, scoped, tag = 'output window, operand 0']
    %12 = vsyncpa [#allocation3], 0
    %13 = vsyncpa [#allocation4], 0
    %s14 = scalar_lea.sflag [#allocation4], 1
    %15 = vsyncpa %s14, 0
    loop: start=0, step=1, limit=4
    $region2: #{tpu_custom_call.1} parent=1 // loop_pre_header
      _
    $region3: #{tpu_custom_call.1} parent=1 // loop_header
      %s17 = sphi 0, %s21
      %p18 = scmp.ge.s32.totalorder %s17, 4
      %s27 = sphi 0, %s29
      %s30 = sphi 0, %s27
      %s31 = sphi 0, %s30
      %s47 = sphi 0, %s31
      %s51 = sphi 0, %s51
      %s53 = sphi 0, %s51
      %s54 = sphi 0, %s53
      %s68 = sphi 0, %s54
      %s72 = sphi 0, %s72
      %s74 = sphi 0, %s72
      %s75 = sphi 0, %s74
      %s89 = sphi 0, %s75
      %s93 = sphi 0, %s93
      %s95 = sphi 0, %s93
      %s96 = sphi 0, %s95
      %s110 = sphi 0, %s96
      %s114 = sphi 0, %s114
      %s116 = sphi 0, %s114
      %s117 = sphi 0, %s116
      %s131 = sphi 0, %s117
      %s135 = sphi 0, %s135
      %s137 = sphi 0, %s135
      %s138 = sphi 0, %s137
      %s152 = sphi 0, %s138
      %s156 = sphi 0, %s156
      %s158 = sphi 0, %s156
      %s159 = sphi 0, %s158
      %s173 = sphi 0, %s159
      %s179 = sphi 0, %s181
      %s182 = sphi 0, %s179
      %s183 = sphi 0, %s182
      %s199 = sphi 0, %s183
    $region4: #{tpu_custom_call.1} parent=1 // loop_header_branch
      %20 = sbr.rel (%p18) target = $region8
    $region5: #{tpu_custom_call.1} parent=1 // loop_body
      %s22 = ssub.s32 %s17, 1
      %s23 = ssub.s32 %s17, 2
      %s24 = sadd.s32 %s17, 1
      %s25 = ssub.s32 %s17, %s24
      %p26 = scmp.eq.s32.totalorder %s25, 0
      %s28 = sadd.s32 %s27, 1
      %s29 = scalar_select %p26, %s27, %s28
      %p32 = pneg %p26
      %p33 = scmp.eq.s32.totalorder %s17, 1
      %p34 = por %p32, %p33
      %p35 = scmp.ne.s32.totalorder %s27, %s30
      %p36 = scmp.eq.s32.totalorder %s17, 0
      %p37 = por %p35, %p36
      %p38 = scmp.ne.s32.totalorder %s27, %s30
      %p39 = scmp.eq.s32.totalorder %s22, 1
      %p40 = por %p38, %p39
      %p41 = scmp.ne.s32.totalorder %s30, %s31
      %p42 = scmp.eq.s32.totalorder %s22, 0
      %p43 = por %p41, %p42
      %p44 = scmp.ne.s32.totalorder %s30, %s31
      %p45 = scmp.eq.s32.totalorder %s23, 1
      %p46 = por %p44, %p45
      %p48 = scmp.ne.s32.totalorder %s31, %s47
      %p49 = scmp.eq.s32.totalorder %s23, 0
      %p50 = por %p48, %p49
      %s52 = sadd.s32 %s51, 1
      %p55 = scmp.eq.s32.totalorder %s17, 1
      %p56 = scmp.ne.s32.totalorder %s51, %s53
      %p57 = scmp.eq.s32.totalorder %s17, 0
      %p58 = por %p56, %p57
      %p59 = scmp.ne.s32.totalorder %s51, %s53
      %p60 = scmp.eq.s32.totalorder %s22, 1
      %p61 = por %p59, %p60
      %p62 = scmp.ne.s32.totalorder %s53, %s54
      %p63 = scmp.eq.s32.totalorder %s22, 0
      %p64 = por %p62, %p63
      %p65 = scmp.ne.s32.totalorder %s53, %s54
      %p66 = scmp.eq.s32.totalorder %s23, 1
      %p67 = por %p65, %p66
      %p69 = scmp.ne.s32.totalorder %s54, %s68
      %p70 = scmp.eq.s32.totalorder %s23, 0
      %p71 = por %p69, %p70
      %s73 = sadd.s32 %s72, 1
      %p76 = scmp.eq.s32.totalorder %s17, 1
      %p77 = scmp.ne.s32.totalorder %s72, %s74
      %p78 = scmp.eq.s32.totalorder %s17, 0
      %p79 = por %p77, %p78
      %p80 = scmp.ne.s32.totalorder %s72, %s74
      %p81 = scmp.eq.s32.totalorder %s22, 1
      %p82 = por %p80, %p81
      %p83 = scmp.ne.s32.totalorder %s74, %s75
      %p84 = scmp.eq.s32.totalorder %s22, 0
      %p85 = por %p83, %p84
      %p86 = scmp.ne.s32.totalorder %s74, %s75
      %p87 = scmp.eq.s32.totalorder %s23, 1
      %p88 = por %p86, %p87
      %p90 = scmp.ne.s32.totalorder %s75, %s89
      %p91 = scmp.eq.s32.totalorder %s23, 0
      %p92 = por %p90, %p91
      %s94 = sadd.s32 %s93, 1
      %p97 = scmp.eq.s32.totalorder %s17, 1
      %p98 = scmp.ne.s32.totalorder %s93, %s95
      %p99 = scmp.eq.s32.totalorder %s17, 0
      %p100 = por %p98, %p99
      %p101 = scmp.ne.s32.totalorder %s93, %s95
      %p102 = scmp.eq.s32.totalorder %s22, 1
      %p103 = por %p101, %p102
      %p104 = scmp.ne.s32.totalorder %s95, %s96
      %p105 = scmp.eq.s32.totalorder %s22, 0
      %p106 = por %p104, %p105
      %p107 = scmp.ne.s32.totalorder %s95, %s96
      %p108 = scmp.eq.s32.totalorder %s23, 1
      %p109 = por %p107, %p108
      %p111 = scmp.ne.s32.totalorder %s96, %s110
      %p112 = scmp.eq.s32.totalorder %s23, 0
      %p113 = por %p111, %p112
      %s115 = sadd.s32 %s114, 1
      %p118 = scmp.eq.s32.totalorder %s17, 1
      %p119 = scmp.ne.s32.totalorder %s114, %s116
      %p120 = scmp.eq.s32.totalorder %s17, 0
      %p121 = por %p119, %p120
      %p122 = scmp.ne.s32.totalorder %s114, %s116
      %p123 = scmp.eq.s32.totalorder %s22, 1
      %p124 = por %p122, %p123
      %p125 = scmp.ne.s32.totalorder %s116, %s117
      %p126 = scmp.eq.s32.totalorder %s22, 0
      %p127 = por %p125, %p126
      %p128 = scmp.ne.s32.totalorder %s116, %s117
      %p129 = scmp.eq.s32.totalorder %s23, 1
      %p130 = por %p128, %p129
      %p132 = scmp.ne.s32.totalorder %s117, %s131
      %p133 = scmp.eq.s32.totalorder %s23, 0
      %p134 = por %p132, %p133
      %s136 = sadd.s32 %s135, 1
      %p139 = scmp.eq.s32.totalorder %s17, 1
      %p140 = scmp.ne.s32.totalorder %s135, %s137
      %p141 = scmp.eq.s32.totalorder %s17, 0
      %p142 = por %p140, %p141
      %p143 = scmp.ne.s32.totalorder %s135, %s137
      %p144 = scmp.eq.s32.totalorder %s22, 1
      %p145 = por %p143, %p144
      %p146 = scmp.ne.s32.totalorder %s137, %s138
      %p147 = scmp.eq.s32.totalorder %s22, 0
      %p148 = por %p146, %p147
      %p149 = scmp.ne.s32.totalorder %s137, %s138
      %p150 = scmp.eq.s32.totalorder %s23, 1
      %p151 = por %p149, %p150
      %p153 = scmp.ne.s32.totalorder %s138, %s152
      %p154 = scmp.eq.s32.totalorder %s23, 0
      %p155 = por %p153, %p154
      %s157 = sadd.s32 %s156, 1
      %p160 = scmp.eq.s32.totalorder %s17, 1
      %p161 = scmp.ne.s32.totalorder %s156, %s158
      %p162 = scmp.eq.s32.totalorder %s17, 0
      %p163 = por %p161, %p162
      %p164 = scmp.ne.s32.totalorder %s156, %s158
      %p165 = scmp.eq.s32.totalorder %s22, 1
      %p166 = por %p164, %p165
      %p167 = scmp.ne.s32.totalorder %s158, %s159
      %p168 = scmp.eq.s32.totalorder %s22, 0
      %p169 = por %p167, %p168
      %p170 = scmp.ne.s32.totalorder %s158, %s159
      %p171 = scmp.eq.s32.totalorder %s23, 1
      %p172 = por %p170, %p171
      %p174 = scmp.ne.s32.totalorder %s159, %s173
      %p175 = scmp.eq.s32.totalorder %s23, 0
      %p176 = por %p174, %p175
      %s177 = ssub.s32 %s17, %s24
      %p178 = scmp.eq.s32.totalorder %s177, 0
      %s180 = sadd.s32 %s179, 1
      %s181 = scalar_select %p178, %s179, %s180
      %p184 = pneg %p178
      %p185 = scmp.eq.s32.totalorder %s17, 1
      %p186 = por %p184, %p185
      %p187 = scmp.ne.s32.totalorder %s179, %s182
      %p188 = scmp.eq.s32.totalorder %s17, 0
      %p189 = por %p187, %p188
      %p190 = scmp.ne.s32.totalorder %s179, %s182
      %p191 = scmp.eq.s32.totalorder %s22, 1
      %p192 = por %p190, %p191
      %p193 = scmp.ne.s32.totalorder %s182, %s183
      %p194 = scmp.eq.s32.totalorder %s22, 0
      %p195 = por %p193, %p194
      %p196 = scmp.ne.s32.totalorder %s182, %s183
      %p197 = scmp.eq.s32.totalorder %s23, 1
      %p198 = por %p196, %p197
      %p200 = scmp.ne.s32.totalorder %s183, %s199
      %p201 = scmp.eq.s32.totalorder %s23, 0
      %p202 = por %p200, %p201
      %p203 = scmp.le.s32.totalorder 1, %s17
      %p204 = scmp.lt.s32.totalorder %s17, 3
      %p205 = pnand %p203, %p204
      %p206 = pneg %p205
      // Predicated region
      $region9: #{tpu_custom_call.1} parent=5 // pred_check
        _
      $region10: #{tpu_custom_call.1} parent=5 // pred_check_branch
        %208 = sbr.rel (%p205) target = $region12
      $region11: #{tpu_custom_call.1} parent=5 // pred_region
        %s209 = ssub.s32 %s17, 1
        // Predicated region
        $region13: #{tpu_custom_call.1} parent=11 // pred_check
          %p210 = pneg %p64
        $region14: #{tpu_custom_call.1} parent=11 // pred_check_branch
          %212 = sbr.rel (%p210) target = $region16
        $region15: #{tpu_custom_call.1} parent=11 // pred_region
          %s214 = ssub.s32 512, 512
          %215 = vsyncadd [#allocation3], %s214
          %s216 = sshll.u32 [#allocation2], 4
          %s217 = int_to_ptr.vmem [resolvable:$true] %s216
          %222 = dma.hbm_to_vmem [thread:$0]  %s1, 512, %s217, [#allocation3], 128, 128, 8
        $region16: #{tpu_custom_call.1} parent=11 // pred_fallthru
          _
        // Predicated region
        $region17: #{tpu_custom_call.1} parent=11 // pred_check
          %p223 = pneg %p85
        $region18: #{tpu_custom_call.1} parent=11 // pred_check_branch
          %225 = sbr.rel (%p223) target = $region20
        $region19: #{tpu_custom_call.1} parent=11 // pred_region
          _
        $region20: #{tpu_custom_call.1} parent=11 // pred_fallthru
          _
        // Predicated region
        $region21: #{tpu_custom_call.1} parent=11 // pred_check
          %p226 = pneg %p106
        $region22: #{tpu_custom_call.1} parent=11 // pred_check_branch
          %228 = sbr.rel (%p226) target = $region24
        $region23: #{tpu_custom_call.1} parent=11 // pred_region
          _
        $region24: #{tpu_custom_call.1} parent=11 // pred_fallthru
          _
        // Predicated region
        $region25: #{tpu_custom_call.1} parent=11 // pred_check
          %p229 = pneg %p127
        $region26: #{tpu_custom_call.1} parent=11 // pred_check_branch
          %231 = sbr.rel (%p229) target = $region28
        $region27: #{tpu_custom_call.1} parent=11 // pred_region
          _
        $region28: #{tpu_custom_call.1} parent=11 // pred_fallthru
          _
        // Predicated region
        $region29: #{tpu_custom_call.1} parent=11 // pred_check
          %p232 = pneg %p148
        $region30: #{tpu_custom_call.1} parent=11 // pred_check_branch
          %234 = sbr.rel (%p232) target = $region32
        $region31: #{tpu_custom_call.1} parent=11 // pred_region
          _
        $region32: #{tpu_custom_call.1} parent=11 // pred_fallthru
          _
        // Predicated region
        $region33: #{tpu_custom_call.1} parent=11 // pred_check
          %p235 = pneg %p169
        $region34: #{tpu_custom_call.1} parent=11 // pred_check_branch
          %237 = sbr.rel (%p235) target = $region36
        $region35: #{tpu_custom_call.1} parent=11 // pred_region
          _
        $region36: #{tpu_custom_call.1} parent=11 // pred_fallthru
          _
      $region12: #{tpu_custom_call.1} parent=5 // pred_fallthru
        _
      %p238 = scmp.lt.s32.totalorder %s17, 2
      // Predicated region
      $region37: #{tpu_custom_call.1} parent=5 // pred_check
        %p239 = pneg %p238
      $region38: #{tpu_custom_call.1} parent=5 // pred_check_branch
        %241 = sbr.rel (%p239) target = $region40
      $region39: #{tpu_custom_call.1} parent=5 // pred_region
        // Predicated region
        $region41: #{tpu_custom_call.1} parent=39 // pred_check
          %p242 = pneg %p37
        $region42: #{tpu_custom_call.1} parent=39 // pred_check_branch
          %244 = sbr.rel (%p242) target = $region44
        $region43: #{tpu_custom_call.1} parent=39 // pred_region
          %p245 = scmp.lt.s32.totalorder %s17, 1
          %s246 = scalar_select %p245, %s17, 1
          %s247 = smul.addr %s246, 8
          %s248 = scalar_lea.vmem %s0, %s247
        $region44: #{tpu_custom_call.1} parent=39 // pred_fallthru
          _
      $region40: #{tpu_custom_call.1} parent=5 // pred_fallthru
        _
      %p249 = scmp.le.s32.totalorder 1, %s17
      %p250 = scmp.lt.s32.totalorder %s17, 3
      %p251 = pnand %p249, %p250
      %p252 = pneg %p251
      // Predicated region
      $region45: #{tpu_custom_call.1} parent=5 // pred_check
        _
      $region46: #{tpu_custom_call.1} parent=5 // pred_check_branch
        %254 = sbr.rel (%p251) target = $region48
      $region47: #{tpu_custom_call.1} parent=5 // pred_region
        %s255 = ssub.s32 %s17, 1
        // Predicated region
        $region49: #{tpu_custom_call.1} parent=47 // pred_check
          %p256 = pneg %p64
        $region50: #{tpu_custom_call.1} parent=47 // pred_check_branch
          %258 = sbr.rel (%p256) target = $region52
        $region51: #{tpu_custom_call.1} parent=47 // pred_region
          %259 = dma.done [#allocation3], 512
        $region52: #{tpu_custom_call.1} parent=47 // pred_fallthru
          _
        %p260 = scmp.lt.s32.totalorder %s22, 1
        %s261 = scalar_select %p260, %s22, 1
        %s262 = smul.addr %s261, 8
        %s263 = scalar_lea.vmem %s0, %s262
        %p264 = pneg %p43
        %p265 = pneg %p40
        %p266 = pneg %p64
        %p267 = pneg %p61
        %p268 = pneg %p85
        %p269 = pneg %p82
        %p270 = pneg %p106
        %p271 = pneg %p103
        %p272 = pneg %p127
        %p273 = pneg %p124
        %p274 = pneg %p148
        %p275 = pneg %p145
        %p276 = pneg %p169
        %p277 = pneg %p166
        %p278 = pneg %p195
        %p279 = pneg %p192
        %s280 = sand.u32 %s182, 1
        %s281 = scalar_lea.sflag [#allocation4], %s280
        %s282 = sand.u32 %s182, 1
        %s283 = smul.addr %s282, 8
        %s284 = scalar_lea.vmem [#allocation5], %s283
        %p285 = scmp.lt.s32.totalorder %s22, 1
        %s286 = scalar_select %p285, %s22, 1
        %s287 = smul.addr %s286, 8
        %s288 = scalar_lea.vmem %s0, %s287
        %v289 = vld [vmem:[%s288] sm:$0xff]
        %v290 = vld [vmem:[%s2] sm:$0x1]
        %v291 = vld [vmem:[%s4] sm:$0x1]
        %v292 = vld [vmem:[%s6] sm:$0x1]
        %v293 = vld [vmem:[#allocation2] sm:$0xff]
        %v294 = vld [vmem:[#allocation2 + $0x8] sm:$0xff]
        %v295 = vld [vmem:[#allocation2 + $0x10] sm:$0xff]
        %v296 = vld [vmem:[#allocation2 + $0x18] sm:$0xff]
        %v298 = vlaneseq
        %v299 = vshrl.u32 %v298, 7
        %v300 = vsub.s32 0, %v299
        %v301 = vrot.slane %v290, %v300
        %vm303 = vcmask 261120
        %v305 = vsel %vm303, %v289, 0
        %307 = vmatprep.subr.mxu0 0.0
        %308 = vmatpush1.msra.mxu0 0.0
        %309 = vmatprep.subr.mxu0 0.0
        %310 = vmatpush1.msra.mxu0 0.0
        %311 = vmatprep.subr.mxu0 0.0
        %312 = vmatpush1.msra.mxu0 0.0
        %313 = vmatprep.subr.mxu0 0.0
        %314 = vmatpush1.msra.mxu0 0.0
        %315 = vmatprep.subr.mxu0 0.0
        %316 = vmatpush1.msra.mxu0 0.0
        %317 = vmatprep.subr.mxu0 0.0
        %318 = vmatpush1.msra.mxu0 0.0
        %319 = vmatprep.subr.mxu0 0.0
        %320 = vmatpush1.msra.mxu0 0.0
        %321 = vmatprep.subr.mxu0 0.0
        %322 = vmatpush1.msra.mxu0 0.0
        %323 = vmatprep.subr.mxu0 0.0
        %324 = vmatpush1.msra.mxu0 0.0
        %325 = vmatprep.subr.mxu0 0.0
        %326 = vmatpush1.msra.mxu0 0.0
        %327 = vmatprep.subr.mxu0 0.0
        %328 = vmatpush1.msra.mxu0 0.0
        %329 = vmatprep.subr.mxu0 0.0
        %330 = vmatpush1.msra.mxu0 0.0
        %331 = vmatprep.subr.mxu0 0.0
        %332 = vmatpush1.msra.mxu0 %v296
        %333 = vmatprep.subr.mxu0 0.0
        %334 = vmatpush1.msra.mxu0 %v295
        %335 = vmatprep.subr.mxu0 0.0
        %336 = vmatpush1.msra.mxu0 %v294
        %337 = vmatprep.subr.mxu0 0.0
        %338 = vmatpush1.msra.mxu0 %v293
        %339 = vmatprep.subr.mxu0 0.0
        %340 = vmatpush2.msra.mxu0 0.0
        %341 = vmatprep.subr.mxu0 0.0
        %342 = vmatpush2.msra.mxu0 0.0
        %343 = vmatprep.subr.mxu0 0.0
        %344 = vmatpush2.msra.mxu0 0.0
        %345 = vmatprep.subr.mxu0 0.0
        %346 = vmatpush2.msra.mxu0 0.0
        %347 = vmatprep.subr.mxu0 0.0
        %348 = vmatpush2.msra.mxu0 0.0
        %349 = vmatprep.subr.mxu0 0.0
        %350 = vmatpush2.msra.mxu0 0.0
        %351 = vmatprep.subr.mxu0 0.0
        %352 = vmatpush2.msra.mxu0 0.0
        %353 = vmatprep.subr.mxu0 0.0
        %354 = vmatpush2.msra.mxu0 0.0
        %355 = vmatprep.subr.mxu0 0.0
        %356 = vmatpush2.msra.mxu0 0.0
        %357 = vmatprep.subr.mxu0 0.0
        %358 = vmatpush2.msra.mxu0 0.0
        %359 = vmatprep.subr.mxu0 0.0
        %360 = vmatpush2.msra.mxu0 0.0
        %361 = vmatprep.subr.mxu0 0.0
        %362 = vmatpush2.msra.mxu0 0.0
        %363 = vmatprep.subr.mxu0 0.0
        %364 = vmatpush2.msra.mxu0 0.0
        %365 = vmatprep.subr.mxu0 0.0
        %366 = vmatpush2.msra.mxu0 0.0
        %367 = vmatprep.subr.mxu0 0.0
        %368 = vmatpush2.msra.mxu0 0.0
        %369 = vmatprep.subr.mxu0 0.0
        %370 = vmatpush2.msra.mxu0 0.0
        %371 = vmatprep.mubr.f32.mxu0 0.0
        %372 = vmatmul.mubr.f32.gmra.mxu0 %v305
        %v373 = vpop.f32.mrf.mxu0
        %v374 = vadd.f32 %v301, %v373
        %v375 = vpop.f32.mrf.mxu0
        %376 = vdwg.mxu0
        %377 = vadd.xlane.f32.xlu0 %v374
        %v378 = vpop.xlane.xlu0 %377
        %v379 = vmul.f32 %v378, 0.015625
        %v380 = vmul.f32 %v374, %v374
        %381 = vadd.xlane.f32.xlu0 %v380
        %v382 = vpop.xlane.xlu0 %381
        %v383 = vmul.f32 %v382, 0.015625
        %v384 = vmul.f32 %v379, %v379
        %v385 = vsub.f32 %v383, %v384
        %v386 = vmax.f32 %v385, 0.0
        %v387 = vsub.f32 %v374, %v379
        %v388 = vadd.f32 %v386, 1e-08
        %v389 = vrsqrt.pop %v388
        %v390 = vmul.f32 %v387, %v389
        %v391 = vmax.f32 %v390, 0.0
        %v392 = vld [vmem:[%s3] sm:$0xff]
        %v393 = vld [vmem:[%s3 + $0x8] sm:$0xff]
        %v394 = vld [vmem:[%s3 + $0x10] sm:$0xff]
        %v395 = vld [vmem:[%s3 + $0x18] sm:$0xff]
        %v396 = vld [vmem:[%s3 + $0x20] sm:$0xff]
        %v397 = vld [vmem:[%s3 + $0x28] sm:$0xff]
        %v398 = vld [vmem:[%s3 + $0x30] sm:$0xff]
        %v399 = vld [vmem:[%s3 + $0x38] sm:$0xff]
        %v400 = vld [vmem:[%s3 + $0x40] sm:$0xff]
        %v401 = vld [vmem:[%s3 + $0x48] sm:$0xff]
        %v402 = vld [vmem:[%s3 + $0x50] sm:$0xff]
        %v403 = vld [vmem:[%s3 + $0x58] sm:$0xff]
        %v404 = vld [vmem:[%s3 + $0x60] sm:$0xff]
        %v405 = vld [vmem:[%s3 + $0x68] sm:$0xff]
        %v406 = vld [vmem:[%s3 + $0x70] sm:$0xff]
        %v407 = vld [vmem:[%s3 + $0x78] sm:$0xff]
        %v409 = vlaneseq
        %v410 = vshrl.u32 %v409, 7
        %v411 = vsub.s32 0, %v410
        %v412 = vrot.slane %v291, %v411
        %414 = vmatprep.subr.mxu0 0.0
        %415 = vmatpush1.msra.mxu0 %v407
        %416 = vmatprep.subr.mxu0 0.0
        %417 = vmatpush1.msra.mxu0 %v406
        %418 = vmatprep.subr.mxu0 0.0
        %419 = vmatpush1.msra.mxu0 %v405
        %420 = vmatprep.subr.mxu0 0.0
        %421 = vmatpush1.msra.mxu0 %v404
        %422 = vmatprep.subr.mxu0 0.0
        %423 = vmatpush1.msra.mxu0 %v403
        %424 = vmatprep.subr.mxu0 0.0
        %425 = vmatpush1.msra.mxu0 %v402
        %426 = vmatprep.subr.mxu0 0.0
        %427 = vmatpush1.msra.mxu0 %v401
        %428 = vmatprep.subr.mxu0 0.0
        %429 = vmatpush1.msra.mxu0 %v400
        %430 = vmatprep.subr.mxu0 0.0
        %431 = vmatpush1.msra.mxu0 %v399
        %432 = vmatprep.subr.mxu0 0.0
        %433 = vmatpush1.msra.mxu0 %v398
        %434 = vmatprep.subr.mxu0 0.0
        %435 = vmatpush1.msra.mxu0 %v397
        %436 = vmatprep.subr.mxu0 0.0
        %437 = vmatpush1.msra.mxu0 %v396
        %438 = vmatprep.subr.mxu0 0.0
        %439 = vmatpush1.msra.mxu0 %v395
        %440 = vmatprep.subr.mxu0 0.0
        %441 = vmatpush1.msra.mxu0 %v394
        %442 = vmatprep.subr.mxu0 0.0
        %443 = vmatpush1.msra.mxu0 %v393
        %444 = vmatprep.subr.mxu0 0.0
        %445 = vmatpush1.msra.mxu0 %v392
        %446 = vmatprep.subr.mxu0 0.0
        %447 = vmatpush2.msra.mxu0 0.0
        %448 = vmatprep.subr.mxu0 0.0
        %449 = vmatpush2.msra.mxu0 0.0
        %450 = vmatprep.subr.mxu0 0.0
        %451 = vmatpush2.msra.mxu0 0.0
        %452 = vmatprep.subr.mxu0 0.0
        %453 = vmatpush2.msra.mxu0 0.0
        %454 = vmatprep.subr.mxu0 0.0
        %455 = vmatpush2.msra.mxu0 0.0
        %456 = vmatprep.subr.mxu0 0.0
        %457 = vmatpush2.msra.mxu0 0.0
        %458 = vmatprep.subr.mxu0 0.0
        %459 = vmatpush2.msra.mxu0 0.0
        %460 = vmatprep.subr.mxu0 0.0
        %461 = vmatpush2.msra.mxu0 0.0
        %462 = vmatprep.subr.mxu0 0.0
        %463 = vmatpush2.msra.mxu0 0.0
        %464 = vmatprep.subr.mxu0 0.0
        %465 = vmatpush2.msra.mxu0 0.0
        %466 = vmatprep.subr.mxu0 0.0
        %467 = vmatpush2.msra.mxu0 0.0
        %468 = vmatprep.subr.mxu0 0.0
        %469 = vmatpush2.msra.mxu0 0.0
        %470 = vmatprep.subr.mxu0 0.0
        %471 = vmatpush2.msra.mxu0 0.0
        %472 = vmatprep.subr.mxu0 0.0
        %473 = vmatpush2.msra.mxu0 0.0
        %474 = vmatprep.subr.mxu0 0.0
        %475 = vmatpush2.msra.mxu0 0.0
        %476 = vmatprep.subr.mxu0 0.0
        %477 = vmatpush2.msra.mxu0 0.0
        %478 = vmatprep.mubr.f32.mxu0 0.0
        %479 = vmatmul.mubr.f32.gmra.mxu0 %v391
        %v480 = vpop.f32.mrf.mxu0
        %v481 = vadd.f32 %v412, %v480
        %v482 = vpop.f32.mrf.mxu0
        %483 = vdwg.mxu0
        %484 = vadd.xlane.f32.xlu0 %v481
        %v485 = vpop.xlane.xlu0 %484
        %v486 = vmul.f32 %v485, 0.015625
        %v487 = vmul.f32 %v481, %v481
        %488 = vadd.xlane.f32.xlu0 %v487
        %v489 = vpop.xlane.xlu0 %488
        %v490 = vmul.f32 %v489, 0.015625
        %v491 = vmul.f32 %v486, %v486
        %v492 = vsub.f32 %v490, %v491
        %v493 = vmax.f32 %v492, 0.0
        %v494 = vsub.f32 %v481, %v486
        %v495 = vadd.f32 %v493, 1e-08
        %v496 = vrsqrt.pop %v495
        %v497 = vmul.f32 %v494, %v496
        %v498 = vmax.f32 %v497, 0.0
        %v499 = vld [vmem:[%s5] sm:$0xff]
        %v500 = vld [vmem:[%s5 + $0x8] sm:$0xff]
        %v501 = vld [vmem:[%s5 + $0x10] sm:$0xff]
        %v502 = vld [vmem:[%s5 + $0x18] sm:$0xff]
        %v503 = vld [vmem:[%s5 + $0x20] sm:$0xff]
        %v504 = vld [vmem:[%s5 + $0x28] sm:$0xff]
        %v505 = vld [vmem:[%s5 + $0x30] sm:$0xff]
        %v506 = vld [vmem:[%s5 + $0x38] sm:$0xff]
        %v507 = vld [vmem:[%s5 + $0x40] sm:$0xff]
        %v508 = vld [vmem:[%s5 + $0x48] sm:$0xff]
        %v509 = vld [vmem:[%s5 + $0x50] sm:$0xff]
        %v510 = vld [vmem:[%s5 + $0x58] sm:$0xff]
        %v511 = vld [vmem:[%s5 + $0x60] sm:$0xff]
        %v512 = vld [vmem:[%s5 + $0x68] sm:$0xff]
        %v513 = vld [vmem:[%s5 + $0x70] sm:$0xff]
        %v514 = vld [vmem:[%s5 + $0x78] sm:$0xff]
        %v516 = vlaneseq
        %v517 = vshrl.u32 %v516, 7
        %v518 = vsub.s32 0, %v517
        %v519 = vrot.slane %v292, %v518
        %521 = vmatprep.subr.mxu0 0.0
        %522 = vmatpush1.msra.mxu0 %v514
        %523 = vmatprep.subr.mxu0 0.0
        %524 = vmatpush1.msra.mxu0 %v513
        %525 = vmatprep.subr.mxu0 0.0
        %526 = vmatpush1.msra.mxu0 %v512
        %527 = vmatprep.subr.mxu0 0.0
        %528 = vmatpush1.msra.mxu0 %v511
        %529 = vmatprep.subr.mxu0 0.0
        %530 = vmatpush1.msra.mxu0 %v510
        %531 = vmatprep.subr.mxu0 0.0
        %532 = vmatpush1.msra.mxu0 %v509
        %533 = vmatprep.subr.mxu0 0.0
        %534 = vmatpush1.msra.mxu0 %v508
        %535 = vmatprep.subr.mxu0 0.0
        %536 = vmatpush1.msra.mxu0 %v507
        %537 = vmatprep.subr.mxu0 0.0
        %538 = vmatpush1.msra.mxu0 %v506
        %539 = vmatprep.subr.mxu0 0.0
        %540 = vmatpush1.msra.mxu0 %v505
        %541 = vmatprep.subr.mxu0 0.0
        %542 = vmatpush1.msra.mxu0 %v504
        %543 = vmatprep.subr.mxu0 0.0
        %544 = vmatpush1.msra.mxu0 %v503
        %545 = vmatprep.subr.mxu0 0.0
        %546 = vmatpush1.msra.mxu0 %v502
        %547 = vmatprep.subr.mxu0 0.0
        %548 = vmatpush1.msra.mxu0 %v501
        %549 = vmatprep.subr.mxu0 0.0
        %550 = vmatpush1.msra.mxu0 %v500
        %551 = vmatprep.subr.mxu0 0.0
        %552 = vmatpush1.msra.mxu0 %v499
        %553 = vmatprep.subr.mxu0 0.0
        %554 = vmatpush2.msra.mxu0 0.0
        %555 = vmatprep.subr.mxu0 0.0
        %556 = vmatpush2.msra.mxu0 0.0
        %557 = vmatprep.subr.mxu0 0.0
        %558 = vmatpush2.msra.mxu0 0.0
        %559 = vmatprep.subr.mxu0 0.0
        %560 = vmatpush2.msra.mxu0 0.0
        %561 = vmatprep.subr.mxu0 0.0
        %562 = vmatpush2.msra.mxu0 0.0
        %563 = vmatprep.subr.mxu0 0.0
        %564 = vmatpush2.msra.mxu0 0.0
        %565 = vmatprep.subr.mxu0 0.0
        %566 = vmatpush2.msra.mxu0 0.0
        %567 = vmatprep.subr.mxu0 0.0
        %568 = vmatpush2.msra.mxu0 0.0
        %569 = vmatprep.subr.mxu0 0.0
        %570 = vmatpush2.msra.mxu0 0.0
        %571 = vmatprep.subr.mxu0 0.0
        %572 = vmatpush2.msra.mxu0 0.0
        %573 = vmatprep.subr.mxu0 0.0
        %574 = vmatpush2.msra.mxu0 0.0
        %575 = vmatprep.subr.mxu0 0.0
        %576 = vmatpush2.msra.mxu0 0.0
        %577 = vmatprep.subr.mxu0 0.0
        %578 = vmatpush2.msra.mxu0 0.0
        %579 = vmatprep.subr.mxu0 0.0
        %580 = vmatpush2.msra.mxu0 0.0
        %581 = vmatprep.subr.mxu0 0.0
        %582 = vmatpush2.msra.mxu0 0.0
        %583 = vmatprep.subr.mxu0 0.0
        %584 = vmatpush2.msra.mxu0 0.0
        %585 = vmatprep.mubr.f32.mxu0 0.0
        %586 = vmatmul.mubr.f32.gmra.mxu0 %v498
        %v587 = vpop.f32.mrf.mxu0
        %v588 = vadd.f32 %v519, %v587
        %v589 = vpop.f32.mrf.mxu0
        %590 = vdwg.mxu0
        %vm591 = vcmask 130048
        %592 = vst.msk [vmem:[%s284] sm:$0xff] %vm591, %v588
        %s593 = sand.u32 %s182, 1
        %s594 = scalar_lea.sflag [#allocation4], %s593
        %s595 = sand.u32 %s182, 1
        %s596 = smul.addr %s595, 8
        %s597 = scalar_lea.vmem [#allocation5], %s596
        // Predicated region
        $region53: #{tpu_custom_call.1} parent=47 // pred_check
          %p598 = pneg %p192
        $region54: #{tpu_custom_call.1} parent=47 // pred_check_branch
          %600 = sbr.rel (%p598) target = $region56
        $region55: #{tpu_custom_call.1} parent=47 // pred_region
          %s602 = ssub.s32 128, 128
          %603 = vsyncadd %s594, %s602
          %s604 = smul.addr %s22, 128
          %s605 = scalar_lea.hbm %s7, %s604
          %s607 = sshll.u32 %s597, 4
          %s608 = int_to_ptr.vmem [resolvable:$true] %s607
          %610 = dma.vmem_to_hbm [thread:$0]  %s608, 128, %s605, %s594
        $region56: #{tpu_custom_call.1} parent=47 // pred_fallthru
          _
      $region48: #{tpu_custom_call.1} parent=5 // pred_fallthru
        _
      %p611 = scmp.le.s32.totalorder 2, %s17
      // Predicated region
      $region57: #{tpu_custom_call.1} parent=5 // pred_check
        %p612 = pneg %p611
      $region58: #{tpu_custom_call.1} parent=5 // pred_check_branch
        %614 = sbr.rel (%p612) target = $region60
      $region59: #{tpu_custom_call.1} parent=5 // pred_region
        %s615 = ssub.s32 %s17, 2
        // Predicated region
        $region61: #{tpu_custom_call.1} parent=59 // pred_check
          %p616 = pneg %p198
        $region62: #{tpu_custom_call.1} parent=59 // pred_check_branch
          %618 = sbr.rel (%p616) target = $region64
        $region63: #{tpu_custom_call.1} parent=59 // pred_region
          %s619 = sand.u32 %s183, 1
          %s620 = scalar_lea.sflag [#allocation4], %s619
          %s621 = sand.u32 %s183, 1
          %s622 = smul.addr %s621, 8
          %s623 = scalar_lea.vmem [#allocation5], %s622
          %624 = dma.done %s620, 128
        $region64: #{tpu_custom_call.1} parent=59 // pred_fallthru
          _
      $region60: #{tpu_custom_call.1} parent=5 // pred_fallthru
        _
    $region6: #{tpu_custom_call.1} parent=1 // loop_footer
      %s21 = sadd.s32 1, %s17
    $region7: #{tpu_custom_call.1} parent=1 // loop_footer_branch
      %16 = sbr.rel target = $region3
    $region8: #{tpu_custom_call.1} parent=1 // loop_exit
      _
    %625 = vsyncpa [#allocation3], 1
    %s626 = scalar_lea.sflag [#allocation3], 1
    %627 = vsyncpa %s626, 1
    %628 = vsyncpa [#allocation4], 1
    %s629 = scalar_lea.sflag [#allocation4], 1
    %630 = vsyncpa %s629, 1

// kernel: tpu_custom_call.1
$region0: #{tpu_custom_call.1}
  #allocation0 [shape = 'u32[]', space=smem, size = 0x4, offset = 0x4, fixed_abs, tag = 'smem constant byte address 0x4 - core index']
  #allocation1 [shape = 'u32[144,128]{1,0:T(1,128)}', space=vmem, size = 0x12000, scoped, tag = 'internal scratch']
  %s0 = inlined_call_operand.vmem [shape: f32[16,32], index: 0, kind: input, shape index: {}]
  %s1 = inlined_call_operand.hbm [shape: f32[32,128], index: 1, kind: input, shape index: {}]
  %s2 = inlined_call_operand.vmem [shape: f32[1,128], index: 2, kind: input, shape index: {}]
  %s3 = inlined_call_operand.vmem [shape: f32[128,128], index: 3, kind: input, shape index: {}]
  %s4 = inlined_call_operand.vmem [shape: f32[1,128], index: 4, kind: input, shape index: {}]
  %s5 = inlined_call_operand.vmem [shape: f32[128,16], index: 5, kind: input, shape index: {}]
  %s6 = inlined_call_operand.vmem [shape: f32[1,16], index: 6, kind: input, shape index: {}]
  %s7 = inlined_call_operand.hbm [shape: f32[16,16], index: 7, kind: output, shape index: {}]
  %s8 = sld [smem:[#allocation0]]
  $region65: #{tpu_custom_call.1} parent=0
    _
  %s10 = ssub.s32 1, %s8
  %s11 = scalar_select 0, %s10, %s8
  $region1: #{tpu_custom_call.1} parent=0
    #allocation2 [shape = 'u8[16384]{0}', space=vmem, size = 0x4000, scoped, tag = 'input window, operand 1, single buffered']
    #allocation3 [shape = 's32[2]{0}', space=sflag, size = 0x8, scoped, tag = 'scoped memory for tpu_custom_call.1']
    #allocation4 [shape = 's32[2]{0}', space=sflag, size = 0x8, scoped, tag = 'scoped memory for tpu_custom_call.1']
    #allocation5 [shape = 'u8[8192]{0}', space=vmem, size = 0x2000, scoped, tag = 'output window, operand 0']
    %12 = vsyncpa [#allocation3], 0
    %13 = vsyncpa [#allocation4], 0
    %s14 = scalar_lea.sflag [#allocation4], 1
    %15 = vsyncpa %s14, 0
    loop: start=0, step=1, limit=4
    $region2: #{tpu_custom_call.1} parent=1 // loop_pre_header
      _
    $region3: #{tpu_custom_call.1} parent=1 // loop_header
      %s17 = sphi 0, %s21
      %p18 = scmp.ge.s32.totalorder %s17, 4
      %s27 = sphi 0, %s29
      %s30 = sphi 0, %s27
      %s31 = sphi 0, %s30
      %s47 = sphi 0, %s31
      %s51 = sphi 0, %s51
      %s53 = sphi 0, %s51
      %s54 = sphi 0, %s53
      %s68 = sphi 0, %s54
      %s72 = sphi 0, %s72
      %s74 = sphi 0, %s72
      %s75 = sphi 0, %s74
      %s89 = sphi 0, %s75
      %s93 = sphi 0, %s93
      %s95 = sphi 0, %s93
      %s96 = sphi 0, %s95
      %s110 = sphi 0, %s96
      %s114 = sphi 0, %s114
      %s116 = sphi 0, %s114
      %s117 = sphi 0, %s116
      %s131 = sphi 0, %s117
      %s135 = sphi 0, %s135
      %s137 = sphi 0, %s135
      %s138 = sphi 0, %s137
      %s152 = sphi 0, %s138
      %s156 = sphi 0, %s156
      %s158 = sphi 0, %s156
      %s159 = sphi 0, %s158
      %s173 = sphi 0, %s159
      %s179 = sphi 0, %s181
      %s182 = sphi 0, %s179
      %s183 = sphi 0, %s182
      %s199 = sphi 0, %s183
    $region4: #{tpu_custom_call.1} parent=1 // loop_header_branch
      %20 = sbr.rel (%p18) target = $region8
    $region5: #{tpu_custom_call.1} parent=1 // loop_body
      %s22 = ssub.s32 %s17, 1
      %s23 = ssub.s32 %s17, 2
      %s24 = sadd.s32 %s17, 1
      %s25 = ssub.s32 %s17, %s24
      %p26 = scmp.eq.s32.totalorder %s25, 0
      %s28 = sadd.s32 %s27, 1
      %s29 = scalar_select %p26, %s27, %s28
      %p32 = pneg %p26
      %p33 = scmp.eq.s32.totalorder %s17, 1
      %p34 = por %p32, %p33
      %p35 = scmp.ne.s32.totalorder %s27, %s30
      %p36 = scmp.eq.s32.totalorder %s17, 0
      %p37 = por %p35, %p36
      %p38 = scmp.ne.s32.totalorder %s27, %s30
      %p39 = scmp.eq.s32.totalorder %s22, 1
      %p40 = por %p38, %p39
      %p41 = scmp.ne.s32.totalorder %s30, %s31
      %p42 = scmp.eq.s32.totalorder %s22, 0
      %p43 = por %p41, %p42
      %p44 = scmp.ne.s32.totalorder %s30, %s31
      %p45 = scmp.eq.s32.totalorder %s23, 1
      %p46 = por %p44, %p45
      %p48 = scmp.ne.s32.totalorder %s31, %s47
      %p49 = scmp.eq.s32.totalorder %s23, 0
      %p50 = por %p48, %p49
      %s52 = sadd.s32 %s51, 1
      %p55 = scmp.eq.s32.totalorder %s17, 1
      %p56 = scmp.ne.s32.totalorder %s51, %s53
      %p57 = scmp.eq.s32.totalorder %s17, 0
      %p58 = por %p56, %p57
      %p59 = scmp.ne.s32.totalorder %s51, %s53
      %p60 = scmp.eq.s32.totalorder %s22, 1
      %p61 = por %p59, %p60
      %p62 = scmp.ne.s32.totalorder %s53, %s54
      %p63 = scmp.eq.s32.totalorder %s22, 0
      %p64 = por %p62, %p63
      %p65 = scmp.ne.s32.totalorder %s53, %s54
      %p66 = scmp.eq.s32.totalorder %s23, 1
      %p67 = por %p65, %p66
      %p69 = scmp.ne.s32.totalorder %s54, %s68
      %p70 = scmp.eq.s32.totalorder %s23, 0
      %p71 = por %p69, %p70
      %s73 = sadd.s32 %s72, 1
      %p76 = scmp.eq.s32.totalorder %s17, 1
      %p77 = scmp.ne.s32.totalorder %s72, %s74
      %p78 = scmp.eq.s32.totalorder %s17, 0
      %p79 = por %p77, %p78
      %p80 = scmp.ne.s32.totalorder %s72, %s74
      %p81 = scmp.eq.s32.totalorder %s22, 1
      %p82 = por %p80, %p81
      %p83 = scmp.ne.s32.totalorder %s74, %s75
      %p84 = scmp.eq.s32.totalorder %s22, 0
      %p85 = por %p83, %p84
      %p86 = scmp.ne.s32.totalorder %s74, %s75
      %p87 = scmp.eq.s32.totalorder %s23, 1
      %p88 = por %p86, %p87
      %p90 = scmp.ne.s32.totalorder %s75, %s89
      %p91 = scmp.eq.s32.totalorder %s23, 0
      %p92 = por %p90, %p91
      %s94 = sadd.s32 %s93, 1
      %p97 = scmp.eq.s32.totalorder %s17, 1
      %p98 = scmp.ne.s32.totalorder %s93, %s95
      %p99 = scmp.eq.s32.totalorder %s17, 0
      %p100 = por %p98, %p99
      %p101 = scmp.ne.s32.totalorder %s93, %s95
      %p102 = scmp.eq.s32.totalorder %s22, 1
      %p103 = por %p101, %p102
      %p104 = scmp.ne.s32.totalorder %s95, %s96
      %p105 = scmp.eq.s32.totalorder %s22, 0
      %p106 = por %p104, %p105
      %p107 = scmp.ne.s32.totalorder %s95, %s96
      %p108 = scmp.eq.s32.totalorder %s23, 1
      %p109 = por %p107, %p108
      %p111 = scmp.ne.s32.totalorder %s96, %s110
      %p112 = scmp.eq.s32.totalorder %s23, 0
      %p113 = por %p111, %p112
      %s115 = sadd.s32 %s114, 1
      %p118 = scmp.eq.s32.totalorder %s17, 1
      %p119 = scmp.ne.s32.totalorder %s114, %s116
      %p120 = scmp.eq.s32.totalorder %s17, 0
      %p121 = por %p119, %p120
      %p122 = scmp.ne.s32.totalorder %s114, %s116
      %p123 = scmp.eq.s32.totalorder %s22, 1
      %p124 = por %p122, %p123
      %p125 = scmp.ne.s32.totalorder %s116, %s117
      %p126 = scmp.eq.s32.totalorder %s22, 0
      %p127 = por %p125, %p126
      %p128 = scmp.ne.s32.totalorder %s116, %s117
      %p129 = scmp.eq.s32.totalorder %s23, 1
      %p130 = por %p128, %p129
      %p132 = scmp.ne.s32.totalorder %s117, %s131
      %p133 = scmp.eq.s32.totalorder %s23, 0
      %p134 = por %p132, %p133
      %s136 = sadd.s32 %s135, 1
      %p139 = scmp.eq.s32.totalorder %s17, 1
      %p140 = scmp.ne.s32.totalorder %s135, %s137
      %p141 = scmp.eq.s32.totalorder %s17, 0
      %p142 = por %p140, %p141
      %p143 = scmp.ne.s32.totalorder %s135, %s137
      %p144 = scmp.eq.s32.totalorder %s22, 1
      %p145 = por %p143, %p144
      %p146 = scmp.ne.s32.totalorder %s137, %s138
      %p147 = scmp.eq.s32.totalorder %s22, 0
      %p148 = por %p146, %p147
      %p149 = scmp.ne.s32.totalorder %s137, %s138
      %p150 = scmp.eq.s32.totalorder %s23, 1
      %p151 = por %p149, %p150
      %p153 = scmp.ne.s32.totalorder %s138, %s152
      %p154 = scmp.eq.s32.totalorder %s23, 0
      %p155 = por %p153, %p154
      %s157 = sadd.s32 %s156, 1
      %p160 = scmp.eq.s32.totalorder %s17, 1
      %p161 = scmp.ne.s32.totalorder %s156, %s158
      %p162 = scmp.eq.s32.totalorder %s17, 0
      %p163 = por %p161, %p162
      %p164 = scmp.ne.s32.totalorder %s156, %s158
      %p165 = scmp.eq.s32.totalorder %s22, 1
      %p166 = por %p164, %p165
      %p167 = scmp.ne.s32.totalorder %s158, %s159
      %p168 = scmp.eq.s32.totalorder %s22, 0
      %p169 = por %p167, %p168
      %p170 = scmp.ne.s32.totalorder %s158, %s159
      %p171 = scmp.eq.s32.totalorder %s23, 1
      %p172 = por %p170, %p171
      %p174 = scmp.ne.s32.totalorder %s159, %s173
      %p175 = scmp.eq.s32.totalorder %s23, 0
      %p176 = por %p174, %p175
      %s177 = ssub.s32 %s17, %s24
      %p178 = scmp.eq.s32.totalorder %s177, 0
      %s180 = sadd.s32 %s179, 1
      %s181 = scalar_select %p178, %s179, %s180
      %p184 = pneg %p178
      %p185 = scmp.eq.s32.totalorder %s17, 1
      %p186 = por %p184, %p185
      %p187 = scmp.ne.s32.totalorder %s179, %s182
      %p188 = scmp.eq.s32.totalorder %s17, 0
      %p189 = por %p187, %p188
      %p190 = scmp.ne.s32.totalorder %s179, %s182
      %p191 = scmp.eq.s32.totalorder %s22, 1
      %p192 = por %p190, %p191
      %p193 = scmp.ne.s32.totalorder %s182, %s183
      %p194 = scmp.eq.s32.totalorder %s22, 0
      %p195 = por %p193, %p194
      %p196 = scmp.ne.s32.totalorder %s182, %s183
      %p197 = scmp.eq.s32.totalorder %s23, 1
      %p198 = por %p196, %p197
      %p200 = scmp.ne.s32.totalorder %s183, %s199
      %p201 = scmp.eq.s32.totalorder %s23, 0
      %p202 = por %p200, %p201
      %p203 = scmp.le.s32.totalorder 1, %s17
      %p204 = scmp.lt.s32.totalorder %s17, 3
      %p205 = pnand %p203, %p204
      %p206 = pneg %p205
      // Predicated region
      $region9: #{tpu_custom_call.1} parent=5 // pred_check
        _
      $region10: #{tpu_custom_call.1} parent=5 // pred_check_branch
        %208 = sbr.rel (%p205) target = $region12
      $region11: #{tpu_custom_call.1} parent=5 // pred_region
        %s209 = ssub.s32 %s17, 1
        // Predicated region
        $region13: #{tpu_custom_call.1} parent=11 // pred_check
          %p210 = pneg %p64
        $region14: #{tpu_custom_call.1} parent=11 // pred_check_branch
          %212 = sbr.rel (%p210) target = $region16
        $region15: #{tpu_custom_call.1} parent=11 // pred_region
          %s214 = ssub.s32 512, 512
          %215 = vsyncadd [#allocation3], %s214
          %s216 = sshll.u32 [#allocation2], 4
          %s217 = int_to_ptr.vmem [resolvable:$true] %s216
          %222 = dma.hbm_to_vmem [thread:$0]  %s1, 512, %s217, [#allocation3], 128, 128, 8
        $region16: #{tpu_custom_call.1} parent=11 // pred_fallthru
          _
        // Predicated region
        $region17: #{tpu_custom_call.1} parent=11 // pred_check
          %p223 = pneg %p85
        $region18: #{tpu_custom_call.1} parent=11 // pred_check_branch
          %225 = sbr.rel (%p223) target = $region20
        $region19: #{tpu_custom_call.1} parent=11 // pred_region
          _
        $region20: #{tpu_custom_call.1} parent=11 // pred_fallthru
          _
        // Predicated region
        $region21: #{tpu_custom_call.1} parent=11 // pred_check
          %p226 = pneg %p106
        $region22: #{tpu_custom_call.1} parent=11 // pred_check_branch
          %228 = sbr.rel (%p226) target = $region24
        $region23: #{tpu_custom_call.1} parent=11 // pred_region
          _
        $region24: #{tpu_custom_call.1} parent=11 // pred_fallthru
          _
        // Predicated region
        $region25: #{tpu_custom_call.1} parent=11 // pred_check
          %p229 = pneg %p127
        $region26: #{tpu_custom_call.1} parent=11 // pred_check_branch
          %231 = sbr.rel (%p229) target = $region28
        $region27: #{tpu_custom_call.1} parent=11 // pred_region
          _
        $region28: #{tpu_custom_call.1} parent=11 // pred_fallthru
          _
        // Predicated region
        $region29: #{tpu_custom_call.1} parent=11 // pred_check
          %p232 = pneg %p148
        $region30: #{tpu_custom_call.1} parent=11 // pred_check_branch
          %234 = sbr.rel (%p232) target = $region32
        $region31: #{tpu_custom_call.1} parent=11 // pred_region
          _
        $region32: #{tpu_custom_call.1} parent=11 // pred_fallthru
          _
        // Predicated region
        $region33: #{tpu_custom_call.1} parent=11 // pred_check
          %p235 = pneg %p169
        $region34: #{tpu_custom_call.1} parent=11 // pred_check_branch
          %237 = sbr.rel (%p235) target = $region36
        $region35: #{tpu_custom_call.1} parent=11 // pred_region
          _
        $region36: #{tpu_custom_call.1} parent=11 // pred_fallthru
          _
      $region12: #{tpu_custom_call.1} parent=5 // pred_fallthru
        _
      %p238 = scmp.lt.s32.totalorder %s17, 2
      // Predicated region
      $region37: #{tpu_custom_call.1} parent=5 // pred_check
        %p239 = pneg %p238
      $region38: #{tpu_custom_call.1} parent=5 // pred_check_branch
        %241 = sbr.rel (%p239) target = $region40
      $region39: #{tpu_custom_call.1} parent=5 // pred_region
        // Predicated region
        $region41: #{tpu_custom_call.1} parent=39 // pred_check
          %p242 = pneg %p37
        $region42: #{tpu_custom_call.1} parent=39 // pred_check_branch
          %244 = sbr.rel (%p242) target = $region44
        $region43: #{tpu_custom_call.1} parent=39 // pred_region
          %p245 = scmp.lt.s32.totalorder %s17, 1
          %s246 = scalar_select %p245, %s17, 1
          %s247 = smul.addr %s246, 8
          %s248 = scalar_lea.vmem %s0, %s247
        $region44: #{tpu_custom_call.1} parent=39 // pred_fallthru
          _
      $region40: #{tpu_custom_call.1} parent=5 // pred_fallthru
        _
      %p249 = scmp.le.s32.totalorder 1, %s17
      %p250 = scmp.lt.s32.totalorder %s17, 3
      %p251 = pnand %p249, %p250
      %p252 = pneg %p251
      // Predicated region
      $region45: #{tpu_custom_call.1} parent=5 // pred_check
        _
      $region46: #{tpu_custom_call.1} parent=5 // pred_check_branch
        %254 = sbr.rel (%p251) target = $region48
      $region47: #{tpu_custom_call.1} parent=5 // pred_region
        %s255 = ssub.s32 %s17, 1
        // Predicated region
        $region49: #{tpu_custom_call.1} parent=47 // pred_check
          %p256 = pneg %p64
        $region50: #{tpu_custom_call.1} parent=47 // pred_check_branch
          %258 = sbr.rel (%p256) target = $region52
        $region51: #{tpu_custom_call.1} parent=47 // pred_region
          %259 = dma.done [#allocation3], 512
        $region52: #{tpu_custom_call.1} parent=47 // pred_fallthru
          _
        %p260 = scmp.lt.s32.totalorder %s22, 1
        %s261 = scalar_select %p260, %s22, 1
        %s262 = smul.addr %s261, 8
        %s263 = scalar_lea.vmem %s0, %s262
        %p264 = pneg %p43
        %p265 = pneg %p40
        %p266 = pneg %p64
        %p267 = pneg %p61
        %p268 = pneg %p85
        %p269 = pneg %p82
        %p270 = pneg %p106
        %p271 = pneg %p103
        %p272 = pneg %p127
        %p273 = pneg %p124
        %p274 = pneg %p148
        %p275 = pneg %p145
        %p276 = pneg %p169
        %p277 = pneg %p166
        %p278 = pneg %p195
        %p279 = pneg %p192
        %s280 = sand.u32 %s182, 1
        %s281 = scalar_lea.sflag [#allocation4], %s280
        %s282 = sand.u32 %s182, 1
        %s283 = smul.addr %s282, 8
        %s284 = scalar_lea.vmem [#allocation5], %s283
        %p285 = scmp.lt.s32.totalorder %s22, 1
        %s286 = scalar_select %p285, %s22, 1
        %s287 = smul.addr %s286, 8
        %s288 = scalar_lea.vmem %s0, %s287
        %v289 = vld [vmem:[%s288] sm:$0xff]
        %v290 = vld [vmem:[%s2] sm:$0x1]
        %v291 = vld [vmem:[%s4] sm:$0x1]
        %v292 = vld [vmem:[%s6] sm:$0x1]
        %v293 = vld [vmem:[#allocation2] sm:$0xff]
        %v294 = vld [vmem:[#allocation2 + $0x8] sm:$0xff]
        %v295 = vld [vmem:[#allocation2 + $0x10] sm:$0xff]
        %v296 = vld [vmem:[#allocation2 + $0x18] sm:$0xff]
        %v298 = vlaneseq
        %v299 = vshrl.u32 %v298, 7
        %v300 = vsub.s32 0, %v299
        %v301 = vrot.slane %v290, %v300
        %vm303 = vcmask 261120
        %v305 = vsel %vm303, %v289, 0
        %307 = vmatprep.subr.mxu0 0.0
        %308 = vmatpush1.msra.mxu0 0.0
        %309 = vmatprep.subr.mxu0 0.0
        %310 = vmatpush1.msra.mxu0 0.0
        %311 = vmatprep.subr.mxu0 0.0
        %312 = vmatpush1.msra.mxu0 0.0
        %313 = vmatprep.subr.mxu0 0.0
        %314 = vmatpush1.msra.mxu0 0.0
        %315 = vmatprep.subr.mxu0 0.0
        %316 = vmatpush1.msra.mxu0 0.0
        %317 = vmatprep.subr.mxu0 0.0
        %318 = vmatpush1.msra.mxu0 0.0
        %319 = vmatprep.subr.mxu0 0.0
        %320 = vmatpush1.msra.mxu0 0.0
        %321 = vmatprep.subr.mxu0 0.0
        %322 = vmatpush1.msra.mxu0 0.0
        %323 = vmatprep.subr.mxu0 0.0
        %324 = vmatpush1.msra.mxu0 0.0
        %325 = vmatprep.subr.mxu0 0.0
        %326 = vmatpush1.msra.mxu0 0.0
        %327 = vmatprep.subr.mxu0 0.0
        %328 = vmatpush1.msra.mxu0 0.0
        %329 = vmatprep.subr.mxu0 0.0
        %330 = vmatpush1.msra.mxu0 0.0
        %331 = vmatprep.subr.mxu0 0.0
        %332 = vmatpush1.msra.mxu0 %v296
        %333 = vmatprep.subr.mxu0 0.0
        %334 = vmatpush1.msra.mxu0 %v295
        %335 = vmatprep.subr.mxu0 0.0
        %336 = vmatpush1.msra.mxu0 %v294
        %337 = vmatprep.subr.mxu0 0.0
        %338 = vmatpush1.msra.mxu0 %v293
        %339 = vmatprep.subr.mxu0 0.0
        %340 = vmatpush2.msra.mxu0 0.0
        %341 = vmatprep.subr.mxu0 0.0
        %342 = vmatpush2.msra.mxu0 0.0
        %343 = vmatprep.subr.mxu0 0.0
        %344 = vmatpush2.msra.mxu0 0.0
        %345 = vmatprep.subr.mxu0 0.0
        %346 = vmatpush2.msra.mxu0 0.0
        %347 = vmatprep.subr.mxu0 0.0
        %348 = vmatpush2.msra.mxu0 0.0
        %349 = vmatprep.subr.mxu0 0.0
        %350 = vmatpush2.msra.mxu0 0.0
        %351 = vmatprep.subr.mxu0 0.0
        %352 = vmatpush2.msra.mxu0 0.0
        %353 = vmatprep.subr.mxu0 0.0
        %354 = vmatpush2.msra.mxu0 0.0
        %355 = vmatprep.subr.mxu0 0.0
        %356 = vmatpush2.msra.mxu0 0.0
        %357 = vmatprep.subr.mxu0 0.0
        %358 = vmatpush2.msra.mxu0 0.0
        %359 = vmatprep.subr.mxu0 0.0
        %360 = vmatpush2.msra.mxu0 0.0
        %361 = vmatprep.subr.mxu0 0.0
        %362 = vmatpush2.msra.mxu0 0.0
        %363 = vmatprep.subr.mxu0 0.0
        %364 = vmatpush2.msra.mxu0 0.0
        %365 = vmatprep.subr.mxu0 0.0
        %366 = vmatpush2.msra.mxu0 0.0
        %367 = vmatprep.subr.mxu0 0.0
        %368 = vmatpush2.msra.mxu0 0.0
        %369 = vmatprep.subr.mxu0 0.0
        %370 = vmatpush2.msra.mxu0 0.0
        %371 = vmatprep.mubr.f32.mxu0 0.0
        %372 = vmatmul.mubr.f32.gmra.mxu0 %v305
        %v373 = vpop.f32.mrf.mxu0
        %v374 = vadd.f32 %v301, %v373
        %v375 = vpop.f32.mrf.mxu0
        %376 = vdwg.mxu0
        %377 = vadd.xlane.f32.xlu0 %v374
        %v378 = vpop.xlane.xlu0 %377
        %v379 = vmul.f32 %v378, 0.015625
        %v380 = vmul.f32 %v374, %v374
        %381 = vadd.xlane.f32.xlu0 %v380
        %v382 = vpop.xlane.xlu0 %381
        %v383 = vmul.f32 %v382, 0.015625
        %v384 = vmul.f32 %v379, %v379
        %v385 = vsub.f32 %v383, %v384
        %v386 = vmax.f32 %v385, 0.0
        %v387 = vsub.f32 %v374, %v379
        %v388 = vadd.f32 %v386, 1e-08
        %v389 = vrsqrt.pop %v388
        %v390 = vmul.f32 %v387, %v389
        %v391 = vmax.f32 %v390, 0.0
        %v392 = vld [vmem:[%s3] sm:$0xff]
        %v393 = vld [vmem:[%s3 + $0x8] sm:$0xff]
        %v394 = vld [vmem:[%s3 + $0x10] sm:$0xff]
        %v395 = vld [vmem:[%s3 + $0x18] sm:$0xff]
        %v396 = vld [vmem:[%s3 + $0x20] sm:$0xff]
        %v397 = vld [vmem:[%s3 + $0x28] sm:$0xff]
        %v398 = vld [vmem:[%s3 + $0x30] sm:$0xff]
        %v399 = vld [vmem:[%s3 + $0x38] sm:$0xff]
        %v400 = vld [vmem:[%s3 + $0x40] sm:$0xff]
        %v401 = vld [vmem:[%s3 + $0x48] sm:$0xff]
        %v402 = vld [vmem:[%s3 + $0x50] sm:$0xff]
        %v403 = vld [vmem:[%s3 + $0x58] sm:$0xff]
        %v404 = vld [vmem:[%s3 + $0x60] sm:$0xff]
        %v405 = vld [vmem:[%s3 + $0x68] sm:$0xff]
        %v406 = vld [vmem:[%s3 + $0x70] sm:$0xff]
        %v407 = vld [vmem:[%s3 + $0x78] sm:$0xff]
        %v409 = vlaneseq
        %v410 = vshrl.u32 %v409, 7
        %v411 = vsub.s32 0, %v410
        %v412 = vrot.slane %v291, %v411
        %414 = vmatprep.subr.mxu0 0.0
        %415 = vmatpush1.msra.mxu0 %v407
        %416 = vmatprep.subr.mxu0 0.0
        %417 = vmatpush1.msra.mxu0 %v406
        %418 = vmatprep.subr.mxu0 0.0
        %419 = vmatpush1.msra.mxu0 %v405
        %420 = vmatprep.subr.mxu0 0.0
        %421 = vmatpush1.msra.mxu0 %v404
        %422 = vmatprep.subr.mxu0 0.0
        %423 = vmatpush1.msra.mxu0 %v403
        %424 = vmatprep.subr.mxu0 0.0
        %425 = vmatpush1.msra.mxu0 %v402
        %426 = vmatprep.subr.mxu0 0.0
        %427 = vmatpush1.msra.mxu0 %v401
        %428 = vmatprep.subr.mxu0 0.0
        %429 = vmatpush1.msra.mxu0 %v400
        %430 = vmatprep.subr.mxu0 0.0
        %431 = vmatpush1.msra.mxu0 %v399
        %432 = vmatprep.subr.mxu0 0.0
        %433 = vmatpush1.msra.mxu0 %v398
        %434 = vmatprep.subr.mxu0 0.0
        %435 = vmatpush1.msra.mxu0 %v397
        %436 = vmatprep.subr.mxu0 0.0
        %437 = vmatpush1.msra.mxu0 %v396
        %438 = vmatprep.subr.mxu0 0.0
        %439 = vmatpush1.msra.mxu0 %v395
        %440 = vmatprep.subr.mxu0 0.0
        %441 = vmatpush1.msra.mxu0 %v394
        %442 = vmatprep.subr.mxu0 0.0
        %443 = vmatpush1.msra.mxu0 %v393
        %444 = vmatprep.subr.mxu0 0.0
        %445 = vmatpush1.msra.mxu0 %v392
        %446 = vmatprep.subr.mxu0 0.0
        %447 = vmatpush2.msra.mxu0 0.0
        %448 = vmatprep.subr.mxu0 0.0
        %449 = vmatpush2.msra.mxu0 0.0
        %450 = vmatprep.subr.mxu0 0.0
        %451 = vmatpush2.msra.mxu0 0.0
        %452 = vmatprep.subr.mxu0 0.0
        %453 = vmatpush2.msra.mxu0 0.0
        %454 = vmatprep.subr.mxu0 0.0
        %455 = vmatpush2.msra.mxu0 0.0
        %456 = vmatprep.subr.mxu0 0.0
        %457 = vmatpush2.msra.mxu0 0.0
        %458 = vmatprep.subr.mxu0 0.0
        %459 = vmatpush2.msra.mxu0 0.0
        %460 = vmatprep.subr.mxu0 0.0
        %461 = vmatpush2.msra.mxu0 0.0
        %462 = vmatprep.subr.mxu0 0.0
        %463 = vmatpush2.msra.mxu0 0.0
        %464 = vmatprep.subr.mxu0 0.0
        %465 = vmatpush2.msra.mxu0 0.0
        %466 = vmatprep.subr.mxu0 0.0
        %467 = vmatpush2.msra.mxu0 0.0
        %468 = vmatprep.subr.mxu0 0.0
        %469 = vmatpush2.msra.mxu0 0.0
        %470 = vmatprep.subr.mxu0 0.0
        %471 = vmatpush2.msra.mxu0 0.0
        %472 = vmatprep.subr.mxu0 0.0
        %473 = vmatpush2.msra.mxu0 0.0
        %474 = vmatprep.subr.mxu0 0.0
        %475 = vmatpush2.msra.mxu0 0.0
        %476 = vmatprep.subr.mxu0 0.0
        %477 = vmatpush2.msra.mxu0 0.0
        %478 = vmatprep.mubr.f32.mxu0 0.0
        %479 = vmatmul.mubr.f32.gmra.mxu0 %v391
        %v480 = vpop.f32.mrf.mxu0
        %v481 = vadd.f32 %v412, %v480
        %v482 = vpop.f32.mrf.mxu0
        %483 = vdwg.mxu0
        %484 = vadd.xlane.f32.xlu0 %v481
        %v485 = vpop.xlane.xlu0 %484
        %v486 = vmul.f32 %v485, 0.015625
        %v487 = vmul.f32 %v481, %v481
        %488 = vadd.xlane.f32.xlu0 %v487
        %v489 = vpop.xlane.xlu0 %488
        %v490 = vmul.f32 %v489, 0.015625
        %v491 = vmul.f32 %v486, %v486
        %v492 = vsub.f32 %v490, %v491
        %v493 = vmax.f32 %v492, 0.0
        %v494 = vsub.f32 %v481, %v486
        %v495 = vadd.f32 %v493, 1e-08
        %v496 = vrsqrt.pop %v495
        %v497 = vmul.f32 %v494, %v496
        %v498 = vmax.f32 %v497, 0.0
        %v499 = vld [vmem:[%s5] sm:$0xff]
        %v500 = vld [vmem:[%s5 + $0x8] sm:$0xff]
        %v501 = vld [vmem:[%s5 + $0x10] sm:$0xff]
        %v502 = vld [vmem:[%s5 + $0x18] sm:$0xff]
        %v503 = vld [vmem:[%s5 + $0x20] sm:$0xff]
        %v504 = vld [vmem:[%s5 + $0x28] sm:$0xff]
        %v505 = vld [vmem:[%s5 + $0x30] sm:$0xff]
        %v506 = vld [vmem:[%s5 + $0x38] sm:$0xff]
        %v507 = vld [vmem:[%s5 + $0x40] sm:$0xff]
        %v508 = vld [vmem:[%s5 + $0x48] sm:$0xff]
        %v509 = vld [vmem:[%s5 + $0x50] sm:$0xff]
        %v510 = vld [vmem:[%s5 + $0x58] sm:$0xff]
        %v511 = vld [vmem:[%s5 + $0x60] sm:$0xff]
        %v512 = vld [vmem:[%s5 + $0x68] sm:$0xff]
        %v513 = vld [vmem:[%s5 + $0x70] sm:$0xff]
        %v514 = vld [vmem:[%s5 + $0x78] sm:$0xff]
        %v516 = vlaneseq
        %v517 = vshrl.u32 %v516, 7
        %v518 = vsub.s32 0, %v517
        %v519 = vrot.slane %v292, %v518
        %521 = vmatprep.subr.mxu0 0.0
        %522 = vmatpush1.msra.mxu0 %v514
        %523 = vmatprep.subr.mxu0 0.0
        %524 = vmatpush1.msra.mxu0 %v513
        %525 = vmatprep.subr.mxu0 0.0
        %526 = vmatpush1.msra.mxu0 %v512
        %527 = vmatprep.subr.mxu0 0.0
        %528 = vmatpush1.msra.mxu0 %v511
        %529 = vmatprep.subr.mxu0 0.0
        %530 = vmatpush1.msra.mxu0 %v510
        %531 = vmatprep.subr.mxu0 0.0
        %532 = vmatpush1.msra.mxu0 %v509
        %533 = vmatprep.subr.mxu0 0.0
        %534 = vmatpush1.msra.mxu0 %v508
        %535 = vmatprep.subr.mxu0 0.0
        %536 = vmatpush1.msra.mxu0 %v507
        %537 = vmatprep.subr.mxu0 0.0
        %538 = vmatpush1.msra.mxu0 %v506
        %539 = vmatprep.subr.mxu0 0.0
        %540 = vmatpush1.msra.mxu0 %v505
        %541 = vmatprep.subr.mxu0 0.0
        %542 = vmatpush1.msra.mxu0 %v504
        %543 = vmatprep.subr.mxu0 0.0
        %544 = vmatpush1.msra.mxu0 %v503
        %545 = vmatprep.subr.mxu0 0.0
        %546 = vmatpush1.msra.mxu0 %v502
        %547 = vmatprep.subr.mxu0 0.0
        %548 = vmatpush1.msra.mxu0 %v501
        %549 = vmatprep.subr.mxu0 0.0
        %550 = vmatpush1.msra.mxu0 %v500
        %551 = vmatprep.subr.mxu0 0.0
        %552 = vmatpush1.msra.mxu0 %v499
        %553 = vmatprep.subr.mxu0 0.0
        %554 = vmatpush2.msra.mxu0 0.0
        %555 = vmatprep.subr.mxu0 0.0
        %556 = vmatpush2.msra.mxu0 0.0
        %557 = vmatprep.subr.mxu0 0.0
        %558 = vmatpush2.msra.mxu0 0.0
        %559 = vmatprep.subr.mxu0 0.0
        %560 = vmatpush2.msra.mxu0 0.0
        %561 = vmatprep.subr.mxu0 0.0
        %562 = vmatpush2.msra.mxu0 0.0
        %563 = vmatprep.subr.mxu0 0.0
        %564 = vmatpush2.msra.mxu0 0.0
        %565 = vmatprep.subr.mxu0 0.0
        %566 = vmatpush2.msra.mxu0 0.0
        %567 = vmatprep.subr.mxu0 0.0
        %568 = vmatpush2.msra.mxu0 0.0
        %569 = vmatprep.subr.mxu0 0.0
        %570 = vmatpush2.msra.mxu0 0.0
        %571 = vmatprep.subr.mxu0 0.0
        %572 = vmatpush2.msra.mxu0 0.0
        %573 = vmatprep.subr.mxu0 0.0
        %574 = vmatpush2.msra.mxu0 0.0
        %575 = vmatprep.subr.mxu0 0.0
        %576 = vmatpush2.msra.mxu0 0.0
        %577 = vmatprep.subr.mxu0 0.0
        %578 = vmatpush2.msra.mxu0 0.0
        %579 = vmatprep.subr.mxu0 0.0
        %580 = vmatpush2.msra.mxu0 0.0
        %581 = vmatprep.subr.mxu0 0.0
        %582 = vmatpush2.msra.mxu0 0.0
        %583 = vmatprep.subr.mxu0 0.0
        %584 = vmatpush2.msra.mxu0 0.0
        %585 = vmatprep.mubr.f32.mxu0 0.0
        %586 = vmatmul.mubr.f32.gmra.mxu0 %v498
        %v587 = vpop.f32.mrf.mxu0
        %v588 = vadd.f32 %v519, %v587
        %v589 = vpop.f32.mrf.mxu0
        %590 = vdwg.mxu0
        %vm591 = vcmask 130048
        %592 = vst.msk [vmem:[%s284] sm:$0xff] %vm591, %v588
        %s593 = sand.u32 %s182, 1
        %s594 = scalar_lea.sflag [#allocation4], %s593
        %s595 = sand.u32 %s182, 1
        %s596 = smul.addr %s595, 8
        %s597 = scalar_lea.vmem [#allocation5], %s596
        // Predicated region
        $region53: #{tpu_custom_call.1} parent=47 // pred_check
          %p598 = pneg %p192
        $region54: #{tpu_custom_call.1} parent=47 // pred_check_branch
          %600 = sbr.rel (%p598) target = $region56
        $region55: #{tpu_custom_call.1} parent=47 // pred_region
          %s602 = ssub.s32 128, 128
          %603 = vsyncadd %s594, %s602
          %s604 = smul.addr %s22, 128
          %s605 = scalar_lea.hbm %s7, %s604
          %s607 = sshll.u32 %s597, 4
          %s608 = int_to_ptr.vmem [resolvable:$true] %s607
          %610 = dma.vmem_to_hbm [thread:$0]  %s608, 128, %s605, %s594
        $region56: #{tpu_custom_call.1} parent=47 // pred_fallthru
          _
      $region48: #{tpu_custom_call.1} parent=5 // pred_fallthru
        _
      %p611 = scmp.le.s32.totalorder 2, %s17
      // Predicated region
      $region57: #{tpu_custom_call.1} parent=5 // pred_check
        %p612 = pneg %p611
      $region58: #{tpu_custom_call.1} parent=5 // pred_check_branch
        %614 = sbr.rel (%p612) target = $region60
      $region59: #{tpu_custom_call.1} parent=5 // pred_region
        %s615 = ssub.s32 %s17, 2
        // Predicated region
        $region61: #{tpu_custom_call.1} parent=59 // pred_check
          %p616 = pneg %p198
        $region62: #{tpu_custom_call.1} parent=59 // pred_check_branch
          %618 = sbr.rel (%p616) target = $region64
        $region63: #{tpu_custom_call.1} parent=59 // pred_region
          %s619 = sand.u32 %s183, 1
          %s620 = scalar_lea.sflag [#allocation4], %s619
          %s621 = sand.u32 %s183, 1
          %s622 = smul.addr %s621, 8
          %s623 = scalar_lea.vmem [#allocation5], %s622
          %624 = dma.done %s620, 128
        $region64: #{tpu_custom_call.1} parent=59 // pred_fallthru
          _
      $region60: #{tpu_custom_call.1} parent=5 // pred_fallthru
        _
    $region6: #{tpu_custom_call.1} parent=1 // loop_footer
      %s21 = sadd.s32 1, %s17
    $region7: #{tpu_custom_call.1} parent=1 // loop_footer_branch
      %16 = sbr.rel target = $region3
    $region8: #{tpu_custom_call.1} parent=1 // loop_exit
      _
    %625 = vsyncpa [#allocation3], 1
    %s626 = scalar_lea.sflag [#allocation3], 1
    %627 = vsyncpa %s626, 1
    %628 = vsyncpa [#allocation4], 1
    %s629 = scalar_lea.sflag [#allocation4], 1
    %630 = vsyncpa %s629, 1

</llo_original>
